<compile_context>
chip_gen: v7x
topology: tpu7x:2x2x1
jax: 0.10.0
libtpu: 0.0.40
codegen_flags: <defaults>
</compile_context>

<pallas_src>
import math

import jax
import jax.numpy as jnp
from jax.experimental import pallas as pl
from jax.experimental.pallas import tpu as pltpu

_LANE = 128
_SUBLANE = 8
_TARGET_TILE_BYTES = 8 * 1024 * 1024    # per tile; x4 when double-buffered in+out
_VMEM_LIMIT_BYTES = 48 * 1024 * 1024    # < v7x 64 MiB physical per TensorCore
_SPLIT_BYTES = 1 << 20                  # above this, balanced >=2-step grid on multi-TC chips
_XLA_BYPASS_BYTES = 256 * 1024          # below this, skip pallas_call entirely


def _round_up(a: int, m: int) -> int:
    return ((a + m - 1) // m) * m


def _num_tensorcores() -> int:
    """Best-effort TensorCores-per-chip (v4/v5p megacore and v7x have 2)."""
    try:
        kind = jax.devices()[0].device_kind.lower()
    except Exception:
        return 2  # default to "split" behaviour: cheap on 1-TC, vital on 2-TC
    return 2 if any(tag in kind for tag in ("v7", "v4", "v5p")) else 1


def _mvn_kernel(x_ref, mean_ref, invstd_ref, o_ref):
    # x_ref: (tile_rows, W); mean_ref / invstd_ref: (1, W) fp32, broadcast
    # across the sublane (row) axis.  Compute fp32, cast on store.
    x = x_ref[...].astype(jnp.float32)
    o_ref[...] = ((x - mean_ref[...]) * invstd_ref[...]).astype(o_ref.dtype)


def mean_variance_norm(x: jax.Array,
                       global_mean: jax.Array,
                       global_invstd: jax.Array) -> jax.Array:
    """(x - mean) * invstd, broadcasting mean/invstd over leading dims."""
    orig_shape = x.shape
    d = orig_shape[-1]
    assert global_mean.shape == (d,)
    assert global_invstd.shape == (d,)

    mean_f32 = global_mean.astype(jnp.float32)
    invstd_f32 = global_invstd.astype(jnp.float32)

    total_bytes = x.size * x.dtype.itemsize

    # --- Small-input bypass: the kernel launch + pipeline prologue dominates
    # below a couple hundred KiB; plain XLA is faster and exact.
    if total_bytes < _XLA_BYPASS_BYTES:
        out = (x.astype(jnp.float32) - mean_f32) * invstd_f32
        return out.astype(x.dtype)

    x2 = x.reshape(-1, d)
    rows = x2.shape[0]

    # --- Lane-dense folding: pack `fold` rows into one lane row of width
    # fold*d, which is always a multiple of 128 (no masked vst / partial DMA
    # rows).  Ragged row counts are padded up (<= fold-1 extra rows).
    fold = _LANE // math.gcd(d, _LANE)
    width = fold * d
    pad = (-rows) % fold
    if pad:
        x2 = jnp.pad(x2, ((0, pad), (0, 0)))
    rows_p = rows + pad
    x2 = x2.reshape(rows_p // fold, width)            # contiguous, free reshape

    # Folded (1, width) fp32 params; tiny, rebuilt per call (large-input path
    # only -- small calls already took the XLA bypass above).
    mean2 = jnp.tile(mean_f32, fold).reshape(1, width)
    invstd2 = jnp.tile(invstd_f32, fold).reshape(1, width)

    frows = x2.shape[0]
    row_bytes = width * x2.dtype.itemsize
    folded_bytes = frows * row_bytes

    # --- Byte-based tile sizing: as many rows as ~_TARGET_TILE_BYTES allows,
    # independent of dtype, sublane-aligned for partial-grid blocks.
    tile_rows = min(frows, max(_SUBLANE, _TARGET_TILE_BYTES // row_bytes))
    if tile_rows < frows:
        tile_rows = max(_SUBLANE, (tile_rows // _SUBLANE) * _SUBLANE)

    # --- Balanced megacore split (multi-TC chips only): pick an even number
    # of grid steps and size tiles so both halves carry ~equal rows.
    # TODO(synk): confirm via xprof that the "parallel" axis is actually
    # sharded across both TensorCores on v7x; if not, switch to CORE_PARALLEL.
    if _num_tensorcores() >= 2 and folded_bytes >= _SPLIT_BYTES:
        steps = max(2, pl.cdiv(frows, tile_rows))
        if steps % 2:
            steps += 1
        tile_rows = max(_SUBLANE, _round_up(pl.cdiv(frows, steps), _SUBLANE))
        tile_rows = min(tile_rows, frows)

    grid = (pl.cdiv(frows, tile_rows),)   # ragged last block clipped by Pallas

    out = pl.pallas_call(
        _mvn_kernel,
        out_shape=jax.ShapeDtypeStruct((frows, width), x.dtype),
        grid_spec=pltpu.PrefetchScalarGridSpec(
            num_scalar_prefetch=0,
            grid=grid,
            in_specs=[
                pl.BlockSpec((tile_rows, width), lambda i: (i, 0)),
                pl.BlockSpec((1, width), lambda i: (0, 0)),
                pl.BlockSpec((1, width), lambda i: (0, 0)),
            ],
            out_specs=pl.BlockSpec((tile_rows, width), lambda i: (i, 0)),
        ),
        compiler_params=pltpu.CompilerParams(
            dimension_semantics=("parallel",),
            vmem_limit_bytes=_VMEM_LIMIT_BYTES,
        ),
    )(x2, mean2, invstd2)

    out = out.reshape(rows_p, d)
    if pad:
        out = out[:rows]
    return out.reshape(orig_shape)


if __name__ == "__main__":
    key = jax.random.PRNGKey(0)
    k_x, k_m, k_s, k_x2, k_x3 = jax.random.split(key, 5)

    input_size = 80  # Phi4-audio fbank feature size

    # Parameters per __init__: shapes (input_size,), kept fp32.
    global_mean = 0.1 * jax.random.normal(k_m, (input_size,), dtype=jnp.float32)
    global_invstd = 1.0 + 0.05 * jax.random.normal(
        k_s, (input_size,), dtype=jnp.float32)

    def ref_fn(x):
        y = (x.astype(jnp.float32) - global_mean) * global_invstd
        return y.astype(x.dtype)

    # Case 1: tiny input -> XLA bypass path.
    x_a = jax.random.normal(k_x, (2, 8, input_size), dtype=jnp.float32)
    out_a = jax.block_until_ready(
        mean_variance_norm(x_a, global_mean, global_invstd))
    assert out_a.shape == x_a.shape and out_a.dtype == x_a.dtype
    assert jnp.allclose(out_a, ref_fn(x_a), atol=1e-5, rtol=1e-5)

    # Case 2: rows divisible by fold -> lane-dense folded Pallas path
    # (large enough to clear the bypass and the megacore-split threshold).
    x_b = jax.random.normal(k_x2, (4, 1024, input_size), dtype=jnp.float32)
    out_b = jax.block_until_ready(
        mean_variance_norm(x_b, global_mean, global_invstd))
    assert out_b.shape == x_b.shape and out_b.dtype == x_b.dtype
    assert jnp.allclose(out_b, ref_fn(x_b), atol=1e-5, rtol=1e-5)

    # Case 3: ragged row count (3003 % 8 != 0), bf16 -> pad-and-fold path.
    x_c = jax.random.normal(k_x3, (3, 1001, input_size), dtype=jnp.bfloat16)
    out_c = jax.block_until_ready(
        mean_variance_norm(x_c, global_mean, global_invstd))
    assert out_c.shape == x_c.shape and out_c.dtype == x_c.dtype
    assert jnp.allclose(out_c.astype(jnp.float32),
                        ref_fn(x_c).astype(jnp.float32), atol=2e-2, rtol=2e-2)

    print("KERNEL_OK")
</pallas_src>

<mosaic_0001>
module attributes {stable_mosaic.version = 11 : i64} {
  func.func @_mvn_kernel(%arg0: i32, %arg1: memref<512x640xf32, #tpu.memory_space<vmem>>, %arg2: memref<1x640xf32, #tpu.memory_space<vmem>>, %arg3: memref<1x640xf32, #tpu.memory_space<vmem>>, %arg4: memref<512x640xf32, #tpu.memory_space<vmem>>) attributes {dimension_semantics = [#tpu.dimension_semantics<parallel>], iteration_bounds = array<i64: 1>, scalar_prefetch = 0 : i64, scratch_operands = 0 : i64, tpu.core_type = #tpu.core_type<tc>, window_params = [{transform_indices = @transform_0, window_bounds = array<i64: 512, 640>}, {pipeline_mode = #tpu.pipeline_mode<synchronous>, transform_indices = @transform_1, window_bounds = array<i64: 1, 640>}, {pipeline_mode = #tpu.pipeline_mode<synchronous>, transform_indices = @transform_2, window_bounds = array<i64: 1, 640>}, {transform_indices = @transform_3, window_bounds = array<i64: 512, 640>}]} {
    %c0 = arith.constant 0 : index
    %c0_0 = arith.constant 0 : index
    %0 = vector.load %arg1[%c0, %c0_0] : memref<512x640xf32, #tpu.memory_space<vmem>>, vector<512x640xf32>
    %c0_1 = arith.constant 0 : index
    %c0_2 = arith.constant 0 : index
    %1 = vector.load %arg2[%c0_1, %c0_2] : memref<1x640xf32, #tpu.memory_space<vmem>>, vector<1x640xf32>
    %2 = vector.broadcast %1 : vector<1x640xf32> to vector<512x640xf32>
    %3 = arith.subf %0, %2 : vector<512x640xf32>
    %c0_3 = arith.constant 0 : index
    %c0_4 = arith.constant 0 : index
    %4 = vector.load %arg3[%c0_3, %c0_4] : memref<1x640xf32, #tpu.memory_space<vmem>>, vector<1x640xf32>
    %5 = vector.broadcast %4 : vector<1x640xf32> to vector<512x640xf32>
    %6 = arith.mulf %3, %5 : vector<512x640xf32>
    %c0_5 = arith.constant 0 : index
    %c0_6 = arith.constant 0 : index
    %7 = vector.load %arg4[%c0_5, %c0_6] : memref<512x640xf32, #tpu.memory_space<vmem>>, vector<512x640xf32>
    tpu.vector_store %arg4[%c0_5, %c0_6], %6 {strides = array<i32>} : memref<512x640xf32, #tpu.memory_space<vmem>>, vector<512x640xf32>,
    return
  }
  func.func @transform_0(%arg0: i32) -> (i32, i32) {
    %c0_i32 = arith.constant 0 : i32
    %c0_i32_0 = arith.constant 0 : i32
    return %arg0, %c0_i32 : i32, i32
  }
  func.func @transform_1(%arg0: i32) -> (i32, i32) {
    %c0_i32 = arith.constant 0 : i32
    %c0_i32_0 = arith.constant 0 : i32
    %c0_i32_1 = arith.constant 0 : i32
    return %c0_i32, %c0_i32_0 : i32, i32
  }
  func.func @transform_2(%arg0: i32) -> (i32, i32) {
    %c0_i32 = arith.constant 0 : i32
    %c0_i32_0 = arith.constant 0 : i32
    %c0_i32_1 = arith.constant 0 : i32
    return %c0_i32, %c0_i32_0 : i32, i32
  }
  func.func @transform_3(%arg0: i32) -> (i32, i32) {
    %c0_i32 = arith.constant 0 : i32
    %c0_i32_0 = arith.constant 0 : i32
    return %arg0, %c0_i32 : i32, i32
  }
}

</mosaic_0001>

<llo_original>
// kernel: tpu_custom_call.1
$region0: #{tpu_custom_call.1}
  #allocation0 [shape = 'u32[]', space=smem, size = 0x4, offset = 0x4, fixed_abs, tag = 'smem constant byte address 0x4 - core index']
  #allocation1 [shape = 'u32[144,128]{1,0:T(1,128)}', space=vmem, size = 0x12000, scoped, tag = 'internal scratch']
  %s0 = inlined_call_operand.hbm [shape: f32[512,640], index: 0, kind: input, shape index: {}]
  %s1 = inlined_call_operand.hbm [shape: f32[1,640], index: 1, kind: input, shape index: {}]
  %s2 = inlined_call_operand.hbm [shape: f32[1,640], index: 2, kind: input, shape index: {}]
  %s3 = inlined_call_operand.hbm [shape: f32[512,640], index: 3, kind: output, shape index: {}]
  %s4 = sld [smem:[#allocation0]]
  $region34: #{tpu_custom_call.1} parent=0
    _
  %s6 = ssub.s32 1, %s4
  %s7 = scalar_select 0, %s6, %s4
  $region1: #{tpu_custom_call.1} parent=0
    #allocation2 [shape = 'u8[1310720]{0}', space=vmem, size = 0x140000, scoped, tag = 'input window, operand 0, single buffered']
    #allocation3 [shape = 's32[1]{0}', space=sflag, size = 0x4, scoped, tag = 'scoped memory for tpu_custom_call.1']
    #allocation4 [shape = 's32[1]{0}', space=sflag, size = 0x4, scoped, tag = 'scoped memory for tpu_custom_call.1']
    #allocation5 [shape = 'u8[2560]{0}', space=vmem, size = 0xc00, scoped, tag = 'input window, operand 1, single buffered']
    #allocation6 [shape = 's32[1]{0}', space=sflag, size = 0x4, scoped, tag = 'scoped memory for tpu_custom_call.1']
    #allocation7 [shape = 'u8[2560]{0}', space=vmem, size = 0xc00, scoped, tag = 'input window, operand 2, single buffered']
    #allocation8 [shape = 'u8[1310720]{0}', space=vmem, size = 0x140000, scoped, tag = 'output window, operand 0, single buffered']
    %8 = vsyncpa [#allocation3], 0
    %9 = vsyncpa [#allocation6], 0
    %10 = vsyncpa [#allocation4], 0
    // Predicated region
    $region2: #{tpu_custom_call.1} parent=1 // pred_check
      _
    $region3: #{tpu_custom_call.1} parent=1 // pred_check_branch
      %12 = sbr.rel (0) target = $region5
    $region4: #{tpu_custom_call.1} parent=1 // pred_region
      %s14 = ssub.s32 40960, 40960
      %15 = vsyncadd [#allocation3], %s14
      %s16 = sshll.u32 [#allocation2], 4
      %s17 = int_to_ptr.vmem [resolvable:$true] %s16
      %22 = dma.hbm_to_vmem [thread:$0]  %s0, 40960, %s17, [#allocation3], 640, 640, 40
    $region5: #{tpu_custom_call.1} parent=1 // pred_fallthru
      _
    // Predicated region
    $region6: #{tpu_custom_call.1} parent=1 // pred_check
      _
    $region7: #{tpu_custom_call.1} parent=1 // pred_check_branch
      %24 = sbr.rel (0) target = $region9
    $region8: #{tpu_custom_call.1} parent=1 // pred_region
      %s26 = ssub.s32 80, 80
      %27 = vsyncadd [#allocation6], %s26
      %s29 = sshll.u32 [#allocation5], 4
      %s30 = int_to_ptr.vmem [resolvable:$true] %s29
      %32 = dma.hbm_to_vmem [thread:$0]  %s1, 80, %s30, [#allocation6]
    $region9: #{tpu_custom_call.1} parent=1 // pred_fallthru
      _
    // Predicated region
    $region10: #{tpu_custom_call.1} parent=1 // pred_check
      _
    $region11: #{tpu_custom_call.1} parent=1 // pred_check_branch
      %34 = sbr.rel (0) target = $region13
    $region12: #{tpu_custom_call.1} parent=1 // pred_region
      %s36 = ssub.s32 80, 80
      %37 = vsyncadd [#allocation6], %s36
      %s39 = sshll.u32 [#allocation7], 4
      %s40 = int_to_ptr.vmem [resolvable:$true] %s39
      %42 = dma.hbm_to_vmem [thread:$0]  %s2, 80, %s40, [#allocation6]
    $region13: #{tpu_custom_call.1} parent=1 // pred_fallthru
      _
    // Predicated region
    $region14: #{tpu_custom_call.1} parent=1 // pred_check
      _
    $region15: #{tpu_custom_call.1} parent=1 // pred_check_branch
      %44 = sbr.rel (0) target = $region17
    $region16: #{tpu_custom_call.1} parent=1 // pred_region
      %45 = dma.done [#allocation3], 40960
    $region17: #{tpu_custom_call.1} parent=1 // pred_fallthru
      _
    // Predicated region
    $region18: #{tpu_custom_call.1} parent=1 // pred_check
      _
    $region19: #{tpu_custom_call.1} parent=1 // pred_check_branch
      %47 = sbr.rel (0) target = $region21
    $region20: #{tpu_custom_call.1} parent=1 // pred_region
      %48 = dma.done [#allocation6], 80
    $region21: #{tpu_custom_call.1} parent=1 // pred_fallthru
      _
    // Predicated region
    $region22: #{tpu_custom_call.1} parent=1 // pred_check
      _
    $region23: #{tpu_custom_call.1} parent=1 // pred_check_branch
      %50 = sbr.rel (0) target = $region25
    $region24: #{tpu_custom_call.1} parent=1 // pred_region
      %51 = dma.done [#allocation6], 80
    $region25: #{tpu_custom_call.1} parent=1 // pred_fallthru
      _
    %v52 = vld [vmem:[#allocation2] sm:$0xff]
    %v53 = vld [vmem:[#allocation2 + $0x8] sm:$0xff]
    %v54 = vld [vmem:[#allocation2 + $0x10] sm:$0xff]
    %v55 = vld [vmem:[#allocation2 + $0x18] sm:$0xff]
    %v56 = vld [vmem:[#allocation2 + $0x20] sm:$0xff]
    %v57 = vld [vmem:[#allocation2 + $0x28] sm:$0xff]
    %v58 = vld [vmem:[#allocation2 + $0x30] sm:$0xff]
    %v59 = vld [vmem:[#allocation2 + $0x38] sm:$0xff]
    %v60 = vld [vmem:[#allocation2 + $0x40] sm:$0xff]
    %v61 = vld [vmem:[#allocation2 + $0x48] sm:$0xff]
    %v62 = vld [vmem:[#allocation2 + $0x50] sm:$0xff]
    %v63 = vld [vmem:[#allocation2 + $0x58] sm:$0xff]
    %v64 = vld [vmem:[#allocation2 + $0x60] sm:$0xff]
    %v65 = vld [vmem:[#allocation2 + $0x68] sm:$0xff]
    %v66 = vld [vmem:[#allocation2 + $0x70] sm:$0xff]
    %v67 = vld [vmem:[#allocation2 + $0x78] sm:$0xff]
    %v68 = vld [vmem:[#allocation2 + $0x80] sm:$0xff]
    %v69 = vld [vmem:[#allocation2 + $0x88] sm:$0xff]
    %v70 = vld [vmem:[#allocation2 + $0x90] sm:$0xff]
    %v71 = vld [vmem:[#allocation2 + $0x98] sm:$0xff]
    %v72 = vld [vmem:[#allocation2 + $0xa0] sm:$0xff]
    %v73 = vld [vmem:[#allocation2 + $0xa8] sm:$0xff]
    %v74 = vld [vmem:[#allocation2 + $0xb0] sm:$0xff]
    %v75 = vld [vmem:[#allocation2 + $0xb8] sm:$0xff]
    %v76 = vld [vmem:[#allocation2 + $0xc0] sm:$0xff]
    %v77 = vld [vmem:[#allocation2 + $0xc8] sm:$0xff]
    %v78 = vld [vmem:[#allocation2 + $0xd0] sm:$0xff]
    %v79 = vld [vmem:[#allocation2 + $0xd8] sm:$0xff]
    %v80 = vld [vmem:[#allocation2 + $0xe0] sm:$0xff]
    %v81 = vld [vmem:[#allocation2 + $0xe8] sm:$0xff]
    %v82 = vld [vmem:[#allocation2 + $0xf0] sm:$0xff]
    %v83 = vld [vmem:[#allocation2 + $0xf8] sm:$0xff]
    %v84 = vld [vmem:[#allocation2 + $0x100] sm:$0xff]
    %v85 = vld [vmem:[#allocation2 + $0x108] sm:$0xff]
    %v86 = vld [vmem:[#allocation2 + $0x110] sm:$0xff]
    %v87 = vld [vmem:[#allocation2 + $0x118] sm:$0xff]
    %v88 = vld [vmem:[#allocation2 + $0x120] sm:$0xff]
    %v89 = vld [vmem:[#allocation2 + $0x128] sm:$0xff]
    %v90 = vld [vmem:[#allocation2 + $0x130] sm:$0xff]
    %v91 = vld [vmem:[#allocation2 + $0x138] sm:$0xff]
    %v92 = vld [vmem:[#allocation2 + $0x140] sm:$0xff]
    %v93 = vld [vmem:[#allocation2 + $0x148] sm:$0xff]
    %v94 = vld [vmem:[#allocation2 + $0x150] sm:$0xff]
    %v95 = vld [vmem:[#allocation2 + $0x158] sm:$0xff]
    %v96 = vld [vmem:[#allocation2 + $0x160] sm:$0xff]
    %v97 = vld [vmem:[#allocation2 + $0x168] sm:$0xff]
    %v98 = vld [vmem:[#allocation2 + $0x170] sm:$0xff]
    %v99 = vld [vmem:[#allocation2 + $0x178] sm:$0xff]
    %v100 = vld [vmem:[#allocation2 + $0x180] sm:$0xff]
    %v101 = vld [vmem:[#allocation2 + $0x188] sm:$0xff]
    %v102 = vld [vmem:[#allocation2 + $0x190] sm:$0xff]
    %v103 = vld [vmem:[#allocation2 + $0x198] sm:$0xff]
    %v104 = vld [vmem:[#allocation2 + $0x1a0] sm:$0xff]
    %v105 = vld [vmem:[#allocation2 + $0x1a8] sm:$0xff]
    %v106 = vld [vmem:[#allocation2 + $0x1b0] sm:$0xff]
    %v107 = vld [vmem:[#allocation2 + $0x1b8] sm:$0xff]
    %v108 = vld [vmem:[#allocation2 + $0x1c0] sm:$0xff]
    %v109 = vld [vmem:[#allocation2 + $0x1c8] sm:$0xff]
    %v110 = vld [vmem:[#allocation2 + $0x1d0] sm:$0xff]
    %v111 = vld [vmem:[#allocation2 + $0x1d8] sm:$0xff]
    %v112 = vld [vmem:[#allocation2 + $0x1e0] sm:$0xff]
    %v113 = vld [vmem:[#allocation2 + $0x1e8] sm:$0xff]
    %v114 = vld [vmem:[#allocation2 + $0x1f0] sm:$0xff]
    %v115 = vld [vmem:[#allocation2 + $0x1f8] sm:$0xff]
    %v116 = vld [vmem:[#allocation2 + $0x200] sm:$0xff]
    %v117 = vld [vmem:[#allocation2 + $0x208] sm:$0xff]
    %v118 = vld [vmem:[#allocation2 + $0x210] sm:$0xff]
    %v119 = vld [vmem:[#allocation2 + $0x218] sm:$0xff]
    %v120 = vld [vmem:[#allocation2 + $0x220] sm:$0xff]
    %v121 = vld [vmem:[#allocation2 + $0x228] sm:$0xff]
    %v122 = vld [vmem:[#allocation2 + $0x230] sm:$0xff]
    %v123 = vld [vmem:[#allocation2 + $0x238] sm:$0xff]
    %v124 = vld [vmem:[#allocation2 + $0x240] sm:$0xff]
    %v125 = vld [vmem:[#allocation2 + $0x248] sm:$0xff]
    %v126 = vld [vmem:[#allocation2 + $0x250] sm:$0xff]
    %v127 = vld [vmem:[#allocation2 + $0x258] sm:$0xff]
    %v128 = vld [vmem:[#allocation2 + $0x260] sm:$0xff]
    %v129 = vld [vmem:[#allocation2 + $0x268] sm:$0xff]
    %v130 = vld [vmem:[#allocation2 + $0x270] sm:$0xff]
    %v131 = vld [vmem:[#allocation2 + $0x278] sm:$0xff]
    %v132 = vld [vmem:[#allocation2 + $0x280] sm:$0xff]
    %v133 = vld [vmem:[#allocation2 + $0x288] sm:$0xff]
    %v134 = vld [vmem:[#allocation2 + $0x290] sm:$0xff]
    %v135 = vld [vmem:[#allocation2 + $0x298] sm:$0xff]
    %v136 = vld [vmem:[#allocation2 + $0x2a0] sm:$0xff]
    %v137 = vld [vmem:[#allocation2 + $0x2a8] sm:$0xff]
    %v138 = vld [vmem:[#allocation2 + $0x2b0] sm:$0xff]
    %v139 = vld [vmem:[#allocation2 + $0x2b8] sm:$0xff]
    %v140 = vld [vmem:[#allocation2 + $0x2c0] sm:$0xff]
    %v141 = vld [vmem:[#allocation2 + $0x2c8] sm:$0xff]
    %v142 = vld [vmem:[#allocation2 + $0x2d0] sm:$0xff]
    %v143 = vld [vmem:[#allocation2 + $0x2d8] sm:$0xff]
    %v144 = vld [vmem:[#allocation2 + $0x2e0] sm:$0xff]
    %v145 = vld [vmem:[#allocation2 + $0x2e8] sm:$0xff]
    %v146 = vld [vmem:[#allocation2 + $0x2f0] sm:$0xff]
    %v147 = vld [vmem:[#allocation2 + $0x2f8] sm:$0xff]
    %v148 = vld [vmem:[#allocation2 + $0x300] sm:$0xff]
    %v149 = vld [vmem:[#allocation2 + $0x308] sm:$0xff]
    %v150 = vld [vmem:[#allocation2 + $0x310] sm:$0xff]
    %v151 = vld [vmem:[#allocation2 + $0x318] sm:$0xff]
    %v152 = vld [vmem:[#allocation2 + $0x320] sm:$0xff]
    %v153 = vld [vmem:[#allocation2 + $0x328] sm:$0xff]
    %v154 = vld [vmem:[#allocation2 + $0x330] sm:$0xff]
    %v155 = vld [vmem:[#allocation2 + $0x338] sm:$0xff]
    %v156 = vld [vmem:[#allocation2 + $0x340] sm:$0xff]
    %v157 = vld [vmem:[#allocation2 + $0x348] sm:$0xff]
    %v158 = vld [vmem:[#allocation2 + $0x350] sm:$0xff]
    %v159 = vld [vmem:[#allocation2 + $0x358] sm:$0xff]
    %v160 = vld [vmem:[#allocation2 + $0x360] sm:$0xff]
    %v161 = vld [vmem:[#allocation2 + $0x368] sm:$0xff]
    %v162 = vld [vmem:[#allocation2 + $0x370] sm:$0xff]
    %v163 = vld [vmem:[#allocation2 + $0x378] sm:$0xff]
    %v164 = vld [vmem:[#allocation2 + $0x380] sm:$0xff]
    %v165 = vld [vmem:[#allocation2 + $0x388] sm:$0xff]
    %v166 = vld [vmem:[#allocation2 + $0x390] sm:$0xff]
    %v167 = vld [vmem:[#allocation2 + $0x398] sm:$0xff]
    %v168 = vld [vmem:[#allocation2 + $0x3a0] sm:$0xff]
    %v169 = vld [vmem:[#allocation2 + $0x3a8] sm:$0xff]
    %v170 = vld [vmem:[#allocation2 + $0x3b0] sm:$0xff]
    %v171 = vld [vmem:[#allocation2 + $0x3b8] sm:$0xff]
    %v172 = vld [vmem:[#allocation2 + $0x3c0] sm:$0xff]
    %v173 = vld [vmem:[#allocation2 + $0x3c8] sm:$0xff]
    %v174 = vld [vmem:[#allocation2 + $0x3d0] sm:$0xff]
    %v175 = vld [vmem:[#allocation2 + $0x3d8] sm:$0xff]
    %v176 = vld [vmem:[#allocation2 + $0x3e0] sm:$0xff]
    %v177 = vld [vmem:[#allocation2 + $0x3e8] sm:$0xff]
    %v178 = vld [vmem:[#allocation2 + $0x3f0] sm:$0xff]
    %v179 = vld [vmem:[#allocation2 + $0x3f8] sm:$0xff]
    %v180 = vld [vmem:[#allocation2 + $0x400] sm:$0xff]
    %v181 = vld [vmem:[#allocation2 + $0x408] sm:$0xff]
    %v182 = vld [vmem:[#allocation2 + $0x410] sm:$0xff]
    %v183 = vld [vmem:[#allocation2 + $0x418] sm:$0xff]
    %v184 = vld [vmem:[#allocation2 + $0x420] sm:$0xff]
    %v185 = vld [vmem:[#allocation2 + $0x428] sm:$0xff]
    %v186 = vld [vmem:[#allocation2 + $0x430] sm:$0xff]
    %v187 = vld [vmem:[#allocation2 + $0x438] sm:$0xff]
    %v188 = vld [vmem:[#allocation2 + $0x440] sm:$0xff]
    %v189 = vld [vmem:[#allocation2 + $0x448] sm:$0xff]
    %v190 = vld [vmem:[#allocation2 + $0x450] sm:$0xff]
    %v191 = vld [vmem:[#allocation2 + $0x458] sm:$0xff]
    %v192 = vld [vmem:[#allocation2 + $0x460] sm:$0xff]
    %v193 = vld [vmem:[#allocation2 + $0x468] sm:$0xff]
    %v194 = vld [vmem:[#allocation2 + $0x470] sm:$0xff]
    %v195 = vld [vmem:[#allocation2 + $0x478] sm:$0xff]
    %v196 = vld [vmem:[#allocation2 + $0x480] sm:$0xff]
    %v197 = vld [vmem:[#allocation2 + $0x488] sm:$0xff]
    %v198 = vld [vmem:[#allocation2 + $0x490] sm:$0xff]
    %v199 = vld [vmem:[#allocation2 + $0x498] sm:$0xff]
    %v200 = vld [vmem:[#allocation2 + $0x4a0] sm:$0xff]
    %v201 = vld [vmem:[#allocation2 + $0x4a8] sm:$0xff]
    %v202 = vld [vmem:[#allocation2 + $0x4b0] sm:$0xff]
    %v203 = vld [vmem:[#allocation2 + $0x4b8] sm:$0xff]
    %v204 = vld [vmem:[#allocation2 + $0x4c0] sm:$0xff]
    %v205 = vld [vmem:[#allocation2 + $0x4c8] sm:$0xff]
    %v206 = vld [vmem:[#allocation2 + $0x4d0] sm:$0xff]
    %v207 = vld [vmem:[#allocation2 + $0x4d8] sm:$0xff]
    %v208 = vld [vmem:[#allocation2 + $0x4e0] sm:$0xff]
    %v209 = vld [vmem:[#allocation2 + $0x4e8] sm:$0xff]
    %v210 = vld [vmem:[#allocation2 + $0x4f0] sm:$0xff]
    %v211 = vld [vmem:[#allocation2 + $0x4f8] sm:$0xff]
    %v212 = vld [vmem:[#allocation2 + $0x500] sm:$0xff]
    %v213 = vld [vmem:[#allocation2 + $0x508] sm:$0xff]
    %v214 = vld [vmem:[#allocation2 + $0x510] sm:$0xff]
    %v215 = vld [vmem:[#allocation2 + $0x518] sm:$0xff]
    %v216 = vld [vmem:[#allocation2 + $0x520] sm:$0xff]
    %v217 = vld [vmem:[#allocation2 + $0x528] sm:$0xff]
    %v218 = vld [vmem:[#allocation2 + $0x530] sm:$0xff]
    %v219 = vld [vmem:[#allocation2 + $0x538] sm:$0xff]
    %v220 = vld [vmem:[#allocation2 + $0x540] sm:$0xff]
    %v221 = vld [vmem:[#allocation2 + $0x548] sm:$0xff]
    %v222 = vld [vmem:[#allocation2 + $0x550] sm:$0xff]
    %v223 = vld [vmem:[#allocation2 + $0x558] sm:$0xff]
    %v224 = vld [vmem:[#allocation2 + $0x560] sm:$0xff]
    %v225 = vld [vmem:[#allocation2 + $0x568] sm:$0xff]
    %v226 = vld [vmem:[#allocation2 + $0x570] sm:$0xff]
    %v227 = vld [vmem:[#allocation2 + $0x578] sm:$0xff]
    %v228 = vld [vmem:[#allocation2 + $0x580] sm:$0xff]
    %v229 = vld [vmem:[#allocation2 + $0x588] sm:$0xff]
    %v230 = vld [vmem:[#allocation2 + $0x590] sm:$0xff]
    %v231 = vld [vmem:[#allocation2 + $0x598] sm:$0xff]
    %v232 = vld [vmem:[#allocation2 + $0x5a0] sm:$0xff]
    %v233 = vld [vmem:[#allocation2 + $0x5a8] sm:$0xff]
    %v234 = vld [vmem:[#allocation2 + $0x5b0] sm:$0xff]
    %v235 = vld [vmem:[#allocation2 + $0x5b8] sm:$0xff]
    %v236 = vld [vmem:[#allocation2 + $0x5c0] sm:$0xff]
    %v237 = vld [vmem:[#allocation2 + $0x5c8] sm:$0xff]
    %v238 = vld [vmem:[#allocation2 + $0x5d0] sm:$0xff]
    %v239 = vld [vmem:[#allocation2 + $0x5d8] sm:$0xff]
    %v240 = vld [vmem:[#allocation2 + $0x5e0] sm:$0xff]
    %v241 = vld [vmem:[#allocation2 + $0x5e8] sm:$0xff]
    %v242 = vld [vmem:[#allocation2 + $0x5f0] sm:$0xff]
    %v243 = vld [vmem:[#allocation2 + $0x5f8] sm:$0xff]
    %v244 = vld [vmem:[#allocation2 + $0x600] sm:$0xff]
    %v245 = vld [vmem:[#allocation2 + $0x608] sm:$0xff]
    %v246 = vld [vmem:[#allocation2 + $0x610] sm:$0xff]
    %v247 = vld [vmem:[#allocation2 + $0x618] sm:$0xff]
    %v248 = vld [vmem:[#allocation2 + $0x620] sm:$0xff]
    %v249 = vld [vmem:[#allocation2 + $0x628] sm:$0xff]
    %v250 = vld [vmem:[#allocation2 + $0x630] sm:$0xff]
    %v251 = vld [vmem:[#allocation2 + $0x638] sm:$0xff]
    %v252 = vld [vmem:[#allocation2 + $0x640] sm:$0xff]
    %v253 = vld [vmem:[#allocation2 + $0x648] sm:$0xff]
    %v254 = vld [vmem:[#allocation2 + $0x650] sm:$0xff]
    %v255 = vld [vmem:[#allocation2 + $0x658] sm:$0xff]
    %v256 = vld [vmem:[#allocation2 + $0x660] sm:$0xff]
    %v257 = vld [vmem:[#allocation2 + $0x668] sm:$0xff]
    %v258 = vld [vmem:[#allocation2 + $0x670] sm:$0xff]
    %v259 = vld [vmem:[#allocation2 + $0x678] sm:$0xff]
    %v260 = vld [vmem:[#allocation2 + $0x680] sm:$0xff]
    %v261 = vld [vmem:[#allocation2 + $0x688] sm:$0xff]
    %v262 = vld [vmem:[#allocation2 + $0x690] sm:$0xff]
    %v263 = vld [vmem:[#allocation2 + $0x698] sm:$0xff]
    %v264 = vld [vmem:[#allocation2 + $0x6a0] sm:$0xff]
    %v265 = vld [vmem:[#allocation2 + $0x6a8] sm:$0xff]
    %v266 = vld [vmem:[#allocation2 + $0x6b0] sm:$0xff]
    %v267 = vld [vmem:[#allocation2 + $0x6b8] sm:$0xff]
    %v268 = vld [vmem:[#allocation2 + $0x6c0] sm:$0xff]
    %v269 = vld [vmem:[#allocation2 + $0x6c8] sm:$0xff]
    %v270 = vld [vmem:[#allocation2 + $0x6d0] sm:$0xff]
    %v271 = vld [vmem:[#allocation2 + $0x6d8] sm:$0xff]
    %v272 = vld [vmem:[#allocation2 + $0x6e0] sm:$0xff]
    %v273 = vld [vmem:[#allocation2 + $0x6e8] sm:$0xff]
    %v274 = vld [vmem:[#allocation2 + $0x6f0] sm:$0xff]
    %v275 = vld [vmem:[#allocation2 + $0x6f8] sm:$0xff]
    %v276 = vld [vmem:[#allocation2 + $0x700] sm:$0xff]
    %v277 = vld [vmem:[#allocation2 + $0x708] sm:$0xff]
    %v278 = vld [vmem:[#allocation2 + $0x710] sm:$0xff]
    %v279 = vld [vmem:[#allocation2 + $0x718] sm:$0xff]
    %v280 = vld [vmem:[#allocation2 + $0x720] sm:$0xff]
    %v281 = vld [vmem:[#allocation2 + $0x728] sm:$0xff]
    %v282 = vld [vmem:[#allocation2 + $0x730] sm:$0xff]
    %v283 = vld [vmem:[#allocation2 + $0x738] sm:$0xff]
    %v284 = vld [vmem:[#allocation2 + $0x740] sm:$0xff]
    %v285 = vld [vmem:[#allocation2 + $0x748] sm:$0xff]
    %v286 = vld [vmem:[#allocation2 + $0x750] sm:$0xff]
    %v287 = vld [vmem:[#allocation2 + $0x758] sm:$0xff]
    %v288 = vld [vmem:[#allocation2 + $0x760] sm:$0xff]
    %v289 = vld [vmem:[#allocation2 + $0x768] sm:$0xff]
    %v290 = vld [vmem:[#allocation2 + $0x770] sm:$0xff]
    %v291 = vld [vmem:[#allocation2 + $0x778] sm:$0xff]
    %v292 = vld [vmem:[#allocation2 + $0x780] sm:$0xff]
    %v293 = vld [vmem:[#allocation2 + $0x788] sm:$0xff]
    %v294 = vld [vmem:[#allocation2 + $0x790] sm:$0xff]
    %v295 = vld [vmem:[#allocation2 + $0x798] sm:$0xff]
    %v296 = vld [vmem:[#allocation2 + $0x7a0] sm:$0xff]
    %v297 = vld [vmem:[#allocation2 + $0x7a8] sm:$0xff]
    %v298 = vld [vmem:[#allocation2 + $0x7b0] sm:$0xff]
    %v299 = vld [vmem:[#allocation2 + $0x7b8] sm:$0xff]
    %v300 = vld [vmem:[#allocation2 + $0x7c0] sm:$0xff]
    %v301 = vld [vmem:[#allocation2 + $0x7c8] sm:$0xff]
    %v302 = vld [vmem:[#allocation2 + $0x7d0] sm:$0xff]
    %v303 = vld [vmem:[#allocation2 + $0x7d8] sm:$0xff]
    %v304 = vld [vmem:[#allocation2 + $0x7e0] sm:$0xff]
    %v305 = vld [vmem:[#allocation2 + $0x7e8] sm:$0xff]
    %v306 = vld [vmem:[#allocation2 + $0x7f0] sm:$0xff]
    %v307 = vld [vmem:[#allocation2 + $0x7f8] sm:$0xff]
    %v308 = vld [vmem:[#allocation2 + $0x800] sm:$0xff]
    %v309 = vld [vmem:[#allocation2 + $0x808] sm:$0xff]
    %v310 = vld [vmem:[#allocation2 + $0x810] sm:$0xff]
    %v311 = vld [vmem:[#allocation2 + $0x818] sm:$0xff]
    %v312 = vld [vmem:[#allocation2 + $0x820] sm:$0xff]
    %v313 = vld [vmem:[#allocation2 + $0x828] sm:$0xff]
    %v314 = vld [vmem:[#allocation2 + $0x830] sm:$0xff]
    %v315 = vld [vmem:[#allocation2 + $0x838] sm:$0xff]
    %v316 = vld [vmem:[#allocation2 + $0x840] sm:$0xff]
    %v317 = vld [vmem:[#allocation2 + $0x848] sm:$0xff]
    %v318 = vld [vmem:[#allocation2 + $0x850] sm:$0xff]
    %v319 = vld [vmem:[#allocation2 + $0x858] sm:$0xff]
    %v320 = vld [vmem:[#allocation2 + $0x860] sm:$0xff]
    %v321 = vld [vmem:[#allocation2 + $0x868] sm:$0xff]
    %v322 = vld [vmem:[#allocation2 + $0x870] sm:$0xff]
    %v323 = vld [vmem:[#allocation2 + $0x878] sm:$0xff]
    %v324 = vld [vmem:[#allocation2 + $0x880] sm:$0xff]
    %v325 = vld [vmem:[#allocation2 + $0x888] sm:$0xff]
    %v326 = vld [vmem:[#allocation2 + $0x890] sm:$0xff]
    %v327 = vld [vmem:[#allocation2 + $0x898] sm:$0xff]
    %v328 = vld [vmem:[#allocation2 + $0x8a0] sm:$0xff]
    %v329 = vld [vmem:[#allocation2 + $0x8a8] sm:$0xff]
    %v330 = vld [vmem:[#allocation2 + $0x8b0] sm:$0xff]
    %v331 = vld [vmem:[#allocation2 + $0x8b8] sm:$0xff]
    %v332 = vld [vmem:[#allocation2 + $0x8c0] sm:$0xff]
    %v333 = vld [vmem:[#allocation2 + $0x8c8] sm:$0xff]
    %v334 = vld [vmem:[#allocation2 + $0x8d0] sm:$0xff]
    %v335 = vld [vmem:[#allocation2 + $0x8d8] sm:$0xff]
    %v336 = vld [vmem:[#allocation2 + $0x8e0] sm:$0xff]
    %v337 = vld [vmem:[#allocation2 + $0x8e8] sm:$0xff]
    %v338 = vld [vmem:[#allocation2 + $0x8f0] sm:$0xff]
    %v339 = vld [vmem:[#allocation2 + $0x8f8] sm:$0xff]
    %v340 = vld [vmem:[#allocation2 + $0x900] sm:$0xff]
    %v341 = vld [vmem:[#allocation2 + $0x908] sm:$0xff]
    %v342 = vld [vmem:[#allocation2 + $0x910] sm:$0xff]
    %v343 = vld [vmem:[#allocation2 + $0x918] sm:$0xff]
    %v344 = vld [vmem:[#allocation2 + $0x920] sm:$0xff]
    %v345 = vld [vmem:[#allocation2 + $0x928] sm:$0xff]
    %v346 = vld [vmem:[#allocation2 + $0x930] sm:$0xff]
    %v347 = vld [vmem:[#allocation2 + $0x938] sm:$0xff]
    %v348 = vld [vmem:[#allocation2 + $0x940] sm:$0xff]
    %v349 = vld [vmem:[#allocation2 + $0x948] sm:$0xff]
    %v350 = vld [vmem:[#allocation2 + $0x950] sm:$0xff]
    %v351 = vld [vmem:[#allocation2 + $0x958] sm:$0xff]
    %v352 = vld [vmem:[#allocation2 + $0x960] sm:$0xff]
    %v353 = vld [vmem:[#allocation2 + $0x968] sm:$0xff]
    %v354 = vld [vmem:[#allocation2 + $0x970] sm:$0xff]
    %v355 = vld [vmem:[#allocation2 + $0x978] sm:$0xff]
    %v356 = vld [vmem:[#allocation2 + $0x980] sm:$0xff]
    %v357 = vld [vmem:[#allocation2 + $0x988] sm:$0xff]
    %v358 = vld [vmem:[#allocation2 + $0x990] sm:$0xff]
    %v359 = vld [vmem:[#allocation2 + $0x998] sm:$0xff]
    %v360 = vld [vmem:[#allocation2 + $0x9a0] sm:$0xff]
    %v361 = vld [vmem:[#allocation2 + $0x9a8] sm:$0xff]
    %v362 = vld [vmem:[#allocation2 + $0x9b0] sm:$0xff]
    %v363 = vld [vmem:[#allocation2 + $0x9b8] sm:$0xff]
    %v364 = vld [vmem:[#allocation2 + $0x9c0] sm:$0xff]
    %v365 = vld [vmem:[#allocation2 + $0x9c8] sm:$0xff]
    %v366 = vld [vmem:[#allocation2 + $0x9d0] sm:$0xff]
    %v367 = vld [vmem:[#allocation2 + $0x9d8] sm:$0xff]
    %v368 = vld [vmem:[#allocation2 + $0x9e0] sm:$0xff]
    %v369 = vld [vmem:[#allocation2 + $0x9e8] sm:$0xff]
    %v370 = vld [vmem:[#allocation2 + $0x9f0] sm:$0xff]
    %v371 = vld [vmem:[#allocation2 + $0x9f8] sm:$0xff]
    %v372 = vld [vmem:[#allocation5] sm:$0x1f]
    %v374 = vlaneseq
    %v375 = vshrl.u32 %v374, 7
    %v376 = vsub.s32 0, %v375
    %v377 = vrot.slane %v372, %v376
    %v378 = vlaneseq
    %v379 = vshrl.u32 %v378, 7
    %v380 = vsub.s32 1, %v379
    %v381 = vrot.slane %v372, %v380
    %v382 = vlaneseq
    %v383 = vshrl.u32 %v382, 7
    %v384 = vsub.s32 2, %v383
    %v385 = vrot.slane %v372, %v384
    %v386 = vlaneseq
    %v387 = vshrl.u32 %v386, 7
    %v388 = vsub.s32 3, %v387
    %v389 = vrot.slane %v372, %v388
    %v390 = vlaneseq
    %v391 = vshrl.u32 %v390, 7
    %v392 = vsub.s32 4, %v391
    %v393 = vrot.slane %v372, %v392
    %v399 = vsub.f32 %v52, %v377
    %v400 = vsub.f32 %v53, %v381
    %v401 = vsub.f32 %v54, %v385
    %v402 = vsub.f32 %v55, %v389
    %v403 = vsub.f32 %v56, %v393
    %v404 = vsub.f32 %v57, %v377
    %v405 = vsub.f32 %v58, %v381
    %v406 = vsub.f32 %v59, %v385
    %v407 = vsub.f32 %v60, %v389
    %v408 = vsub.f32 %v61, %v393
    %v409 = vsub.f32 %v62, %v377
    %v410 = vsub.f32 %v63, %v381
    %v411 = vsub.f32 %v64, %v385
    %v412 = vsub.f32 %v65, %v389
    %v413 = vsub.f32 %v66, %v393
    %v414 = vsub.f32 %v67, %v377
    %v415 = vsub.f32 %v68, %v381
    %v416 = vsub.f32 %v69, %v385
    %v417 = vsub.f32 %v70, %v389
    %v418 = vsub.f32 %v71, %v393
    %v419 = vsub.f32 %v72, %v377
    %v420 = vsub.f32 %v73, %v381
    %v421 = vsub.f32 %v74, %v385
    %v422 = vsub.f32 %v75, %v389
    %v423 = vsub.f32 %v76, %v393
    %v424 = vsub.f32 %v77, %v377
    %v425 = vsub.f32 %v78, %v381
    %v426 = vsub.f32 %v79, %v385
    %v427 = vsub.f32 %v80, %v389
    %v428 = vsub.f32 %v81, %v393
    %v429 = vsub.f32 %v82, %v377
    %v430 = vsub.f32 %v83, %v381
    %v431 = vsub.f32 %v84, %v385
    %v432 = vsub.f32 %v85, %v389
    %v433 = vsub.f32 %v86, %v393
    %v434 = vsub.f32 %v87, %v377
    %v435 = vsub.f32 %v88, %v381
    %v436 = vsub.f32 %v89, %v385
    %v437 = vsub.f32 %v90, %v389
    %v438 = vsub.f32 %v91, %v393
    %v439 = vsub.f32 %v92, %v377
    %v440 = vsub.f32 %v93, %v381
    %v441 = vsub.f32 %v94, %v385
    %v442 = vsub.f32 %v95, %v389
    %v443 = vsub.f32 %v96, %v393
    %v444 = vsub.f32 %v97, %v377
    %v445 = vsub.f32 %v98, %v381
    %v446 = vsub.f32 %v99, %v385
    %v447 = vsub.f32 %v100, %v389
    %v448 = vsub.f32 %v101, %v393
    %v449 = vsub.f32 %v102, %v377
    %v450 = vsub.f32 %v103, %v381
    %v451 = vsub.f32 %v104, %v385
    %v452 = vsub.f32 %v105, %v389
    %v453 = vsub.f32 %v106, %v393
    %v454 = vsub.f32 %v107, %v377
    %v455 = vsub.f32 %v108, %v381
    %v456 = vsub.f32 %v109, %v385
    %v457 = vsub.f32 %v110, %v389
    %v458 = vsub.f32 %v111, %v393
    %v459 = vsub.f32 %v112, %v377
    %v460 = vsub.f32 %v113, %v381
    %v461 = vsub.f32 %v114, %v385
    %v462 = vsub.f32 %v115, %v389
    %v463 = vsub.f32 %v116, %v393
    %v464 = vsub.f32 %v117, %v377
    %v465 = vsub.f32 %v118, %v381
    %v466 = vsub.f32 %v119, %v385
    %v467 = vsub.f32 %v120, %v389
    %v468 = vsub.f32 %v121, %v393
    %v469 = vsub.f32 %v122, %v377
    %v470 = vsub.f32 %v123, %v381
    %v471 = vsub.f32 %v124, %v385
    %v472 = vsub.f32 %v125, %v389
    %v473 = vsub.f32 %v126, %v393
    %v474 = vsub.f32 %v127, %v377
    %v475 = vsub.f32 %v128, %v381
    %v476 = vsub.f32 %v129, %v385
    %v477 = vsub.f32 %v130, %v389
    %v478 = vsub.f32 %v131, %v393
    %v479 = vsub.f32 %v132, %v377
    %v480 = vsub.f32 %v133, %v381
    %v481 = vsub.f32 %v134, %v385
    %v482 = vsub.f32 %v135, %v389
    %v483 = vsub.f32 %v136, %v393
    %v484 = vsub.f32 %v137, %v377
    %v485 = vsub.f32 %v138, %v381
    %v486 = vsub.f32 %v139, %v385
    %v487 = vsub.f32 %v140, %v389
    %v488 = vsub.f32 %v141, %v393
    %v489 = vsub.f32 %v142, %v377
    %v490 = vsub.f32 %v143, %v381
    %v491 = vsub.f32 %v144, %v385
    %v492 = vsub.f32 %v145, %v389
    %v493 = vsub.f32 %v146, %v393
    %v494 = vsub.f32 %v147, %v377
    %v495 = vsub.f32 %v148, %v381
    %v496 = vsub.f32 %v149, %v385
    %v497 = vsub.f32 %v150, %v389
    %v498 = vsub.f32 %v151, %v393
    %v499 = vsub.f32 %v152, %v377
    %v500 = vsub.f32 %v153, %v381
    %v501 = vsub.f32 %v154, %v385
    %v502 = vsub.f32 %v155, %v389
    %v503 = vsub.f32 %v156, %v393
    %v504 = vsub.f32 %v157, %v377
    %v505 = vsub.f32 %v158, %v381
    %v506 = vsub.f32 %v159, %v385
    %v507 = vsub.f32 %v160, %v389
    %v508 = vsub.f32 %v161, %v393
    %v509 = vsub.f32 %v162, %v377
    %v510 = vsub.f32 %v163, %v381
    %v511 = vsub.f32 %v164, %v385
    %v512 = vsub.f32 %v165, %v389
    %v513 = vsub.f32 %v166, %v393
    %v514 = vsub.f32 %v167, %v377
    %v515 = vsub.f32 %v168, %v381
    %v516 = vsub.f32 %v169, %v385
    %v517 = vsub.f32 %v170, %v389
    %v518 = vsub.f32 %v171, %v393
    %v519 = vsub.f32 %v172, %v377
    %v520 = vsub.f32 %v173, %v381
    %v521 = vsub.f32 %v174, %v385
    %v522 = vsub.f32 %v175, %v389
    %v523 = vsub.f32 %v176, %v393
    %v524 = vsub.f32 %v177, %v377
    %v525 = vsub.f32 %v178, %v381
    %v526 = vsub.f32 %v179, %v385
    %v527 = vsub.f32 %v180, %v389
    %v528 = vsub.f32 %v181, %v393
    %v529 = vsub.f32 %v182, %v377
    %v530 = vsub.f32 %v183, %v381
    %v531 = vsub.f32 %v184, %v385
    %v532 = vsub.f32 %v185, %v389
    %v533 = vsub.f32 %v186, %v393
    %v534 = vsub.f32 %v187, %v377
    %v535 = vsub.f32 %v188, %v381
    %v536 = vsub.f32 %v189, %v385
    %v537 = vsub.f32 %v190, %v389
    %v538 = vsub.f32 %v191, %v393
    %v539 = vsub.f32 %v192, %v377
    %v540 = vsub.f32 %v193, %v381
    %v541 = vsub.f32 %v194, %v385
    %v542 = vsub.f32 %v195, %v389
    %v543 = vsub.f32 %v196, %v393
    %v544 = vsub.f32 %v197, %v377
    %v545 = vsub.f32 %v198, %v381
    %v546 = vsub.f32 %v199, %v385
    %v547 = vsub.f32 %v200, %v389
    %v548 = vsub.f32 %v201, %v393
    %v549 = vsub.f32 %v202, %v377
    %v550 = vsub.f32 %v203, %v381
    %v551 = vsub.f32 %v204, %v385
    %v552 = vsub.f32 %v205, %v389
    %v553 = vsub.f32 %v206, %v393
    %v554 = vsub.f32 %v207, %v377
    %v555 = vsub.f32 %v208, %v381
    %v556 = vsub.f32 %v209, %v385
    %v557 = vsub.f32 %v210, %v389
    %v558 = vsub.f32 %v211, %v393
    %v559 = vsub.f32 %v212, %v377
    %v560 = vsub.f32 %v213, %v381
    %v561 = vsub.f32 %v214, %v385
    %v562 = vsub.f32 %v215, %v389
    %v563 = vsub.f32 %v216, %v393
    %v564 = vsub.f32 %v217, %v377
    %v565 = vsub.f32 %v218, %v381
    %v566 = vsub.f32 %v219, %v385
    %v567 = vsub.f32 %v220, %v389
    %v568 = vsub.f32 %v221, %v393
    %v569 = vsub.f32 %v222, %v377
    %v570 = vsub.f32 %v223, %v381
    %v571 = vsub.f32 %v224, %v385
    %v572 = vsub.f32 %v225, %v389
    %v573 = vsub.f32 %v226, %v393
    %v574 = vsub.f32 %v227, %v377
    %v575 = vsub.f32 %v228, %v381
    %v576 = vsub.f32 %v229, %v385
    %v577 = vsub.f32 %v230, %v389
    %v578 = vsub.f32 %v231, %v393
    %v579 = vsub.f32 %v232, %v377
    %v580 = vsub.f32 %v233, %v381
    %v581 = vsub.f32 %v234, %v385
    %v582 = vsub.f32 %v235, %v389
    %v583 = vsub.f32 %v236, %v393
    %v584 = vsub.f32 %v237, %v377
    %v585 = vsub.f32 %v238, %v381
    %v586 = vsub.f32 %v239, %v385
    %v587 = vsub.f32 %v240, %v389
    %v588 = vsub.f32 %v241, %v393
    %v589 = vsub.f32 %v242, %v377
    %v590 = vsub.f32 %v243, %v381
    %v591 = vsub.f32 %v244, %v385
    %v592 = vsub.f32 %v245, %v389
    %v593 = vsub.f32 %v246, %v393
    %v594 = vsub.f32 %v247, %v377
    %v595 = vsub.f32 %v248, %v381
    %v596 = vsub.f32 %v249, %v385
    %v597 = vsub.f32 %v250, %v389
    %v598 = vsub.f32 %v251, %v393
    %v599 = vsub.f32 %v252, %v377
    %v600 = vsub.f32 %v253, %v381
    %v601 = vsub.f32 %v254, %v385
    %v602 = vsub.f32 %v255, %v389
    %v603 = vsub.f32 %v256, %v393
    %v604 = vsub.f32 %v257, %v377
    %v605 = vsub.f32 %v258, %v381
    %v606 = vsub.f32 %v259, %v385
    %v607 = vsub.f32 %v260, %v389
    %v608 = vsub.f32 %v261, %v393
    %v609 = vsub.f32 %v262, %v377
    %v610 = vsub.f32 %v263, %v381
    %v611 = vsub.f32 %v264, %v385
    %v612 = vsub.f32 %v265, %v389
    %v613 = vsub.f32 %v266, %v393
    %v614 = vsub.f32 %v267, %v377
    %v615 = vsub.f32 %v268, %v381
    %v616 = vsub.f32 %v269, %v385
    %v617 = vsub.f32 %v270, %v389
    %v618 = vsub.f32 %v271, %v393
    %v619 = vsub.f32 %v272, %v377
    %v620 = vsub.f32 %v273, %v381
    %v621 = vsub.f32 %v274, %v385
    %v622 = vsub.f32 %v275, %v389
    %v623 = vsub.f32 %v276, %v393
    %v624 = vsub.f32 %v277, %v377
    %v625 = vsub.f32 %v278, %v381
    %v626 = vsub.f32 %v279, %v385
    %v627 = vsub.f32 %v280, %v389
    %v628 = vsub.f32 %v281, %v393
    %v629 = vsub.f32 %v282, %v377
    %v630 = vsub.f32 %v283, %v381
    %v631 = vsub.f32 %v284, %v385
    %v632 = vsub.f32 %v285, %v389
    %v633 = vsub.f32 %v286, %v393
    %v634 = vsub.f32 %v287, %v377
    %v635 = vsub.f32 %v288, %v381
    %v636 = vsub.f32 %v289, %v385
    %v637 = vsub.f32 %v290, %v389
    %v638 = vsub.f32 %v291, %v393
    %v639 = vsub.f32 %v292, %v377
    %v640 = vsub.f32 %v293, %v381
    %v641 = vsub.f32 %v294, %v385
    %v642 = vsub.f32 %v295, %v389
    %v643 = vsub.f32 %v296, %v393
    %v644 = vsub.f32 %v297, %v377
    %v645 = vsub.f32 %v298, %v381
    %v646 = vsub.f32 %v299, %v385
    %v647 = vsub.f32 %v300, %v389
    %v648 = vsub.f32 %v301, %v393
    %v649 = vsub.f32 %v302, %v377
    %v650 = vsub.f32 %v303, %v381
    %v651 = vsub.f32 %v304, %v385
    %v652 = vsub.f32 %v305, %v389
    %v653 = vsub.f32 %v306, %v393
    %v654 = vsub.f32 %v307, %v377
    %v655 = vsub.f32 %v308, %v381
    %v656 = vsub.f32 %v309, %v385
    %v657 = vsub.f32 %v310, %v389
    %v658 = vsub.f32 %v311, %v393
    %v659 = vsub.f32 %v312, %v377
    %v660 = vsub.f32 %v313, %v381
    %v661 = vsub.f32 %v314, %v385
    %v662 = vsub.f32 %v315, %v389
    %v663 = vsub.f32 %v316, %v393
    %v664 = vsub.f32 %v317, %v377
    %v665 = vsub.f32 %v318, %v381
    %v666 = vsub.f32 %v319, %v385
    %v667 = vsub.f32 %v320, %v389
    %v668 = vsub.f32 %v321, %v393
    %v669 = vsub.f32 %v322, %v377
    %v670 = vsub.f32 %v323, %v381
    %v671 = vsub.f32 %v324, %v385
    %v672 = vsub.f32 %v325, %v389
    %v673 = vsub.f32 %v326, %v393
    %v674 = vsub.f32 %v327, %v377
    %v675 = vsub.f32 %v328, %v381
    %v676 = vsub.f32 %v329, %v385
    %v677 = vsub.f32 %v330, %v389
    %v678 = vsub.f32 %v331, %v393
    %v679 = vsub.f32 %v332, %v377
    %v680 = vsub.f32 %v333, %v381
    %v681 = vsub.f32 %v334, %v385
    %v682 = vsub.f32 %v335, %v389
    %v683 = vsub.f32 %v336, %v393
    %v684 = vsub.f32 %v337, %v377
    %v685 = vsub.f32 %v338, %v381
    %v686 = vsub.f32 %v339, %v385
    %v687 = vsub.f32 %v340, %v389
    %v688 = vsub.f32 %v341, %v393
    %v689 = vsub.f32 %v342, %v377
    %v690 = vsub.f32 %v343, %v381
    %v691 = vsub.f32 %v344, %v385
    %v692 = vsub.f32 %v345, %v389
    %v693 = vsub.f32 %v346, %v393
    %v694 = vsub.f32 %v347, %v377
    %v695 = vsub.f32 %v348, %v381
    %v696 = vsub.f32 %v349, %v385
    %v697 = vsub.f32 %v350, %v389
    %v698 = vsub.f32 %v351, %v393
    %v699 = vsub.f32 %v352, %v377
    %v700 = vsub.f32 %v353, %v381
    %v701 = vsub.f32 %v354, %v385
    %v702 = vsub.f32 %v355, %v389
    %v703 = vsub.f32 %v356, %v393
    %v704 = vsub.f32 %v357, %v377
    %v705 = vsub.f32 %v358, %v381
    %v706 = vsub.f32 %v359, %v385
    %v707 = vsub.f32 %v360, %v389
    %v708 = vsub.f32 %v361, %v393
    %v709 = vsub.f32 %v362, %v377
    %v710 = vsub.f32 %v363, %v381
    %v711 = vsub.f32 %v364, %v385
    %v712 = vsub.f32 %v365, %v389
    %v713 = vsub.f32 %v366, %v393
    %v714 = vsub.f32 %v367, %v377
    %v715 = vsub.f32 %v368, %v381
    %v716 = vsub.f32 %v369, %v385
    %v717 = vsub.f32 %v370, %v389
    %v718 = vsub.f32 %v371, %v393
    %v719 = vld [vmem:[#allocation7] sm:$0x1f]
    %v721 = vlaneseq
    %v722 = vshrl.u32 %v721, 7
    %v723 = vsub.s32 0, %v722
    %v724 = vrot.slane %v719, %v723
    %v725 = vlaneseq
    %v726 = vshrl.u32 %v725, 7
    %v727 = vsub.s32 1, %v726
    %v728 = vrot.slane %v719, %v727
    %v729 = vlaneseq
    %v730 = vshrl.u32 %v729, 7
    %v731 = vsub.s32 2, %v730
    %v732 = vrot.slane %v719, %v731
    %v733 = vlaneseq
    %v734 = vshrl.u32 %v733, 7
    %v735 = vsub.s32 3, %v734
    %v736 = vrot.slane %v719, %v735
    %v737 = vlaneseq
    %v738 = vshrl.u32 %v737, 7
    %v739 = vsub.s32 4, %v738
    %v740 = vrot.slane %v719, %v739
    %v746 = vmul.f32 %v399, %v724
    %v747 = vmul.f32 %v400, %v728
    %v748 = vmul.f32 %v401, %v732
    %v749 = vmul.f32 %v402, %v736
    %v750 = vmul.f32 %v403, %v740
    %v751 = vmul.f32 %v404, %v724
    %v752 = vmul.f32 %v405, %v728
    %v753 = vmul.f32 %v406, %v732
    %v754 = vmul.f32 %v407, %v736
    %v755 = vmul.f32 %v408, %v740
    %v756 = vmul.f32 %v409, %v724
    %v757 = vmul.f32 %v410, %v728
    %v758 = vmul.f32 %v411, %v732
    %v759 = vmul.f32 %v412, %v736
    %v760 = vmul.f32 %v413, %v740
    %v761 = vmul.f32 %v414, %v724
    %v762 = vmul.f32 %v415, %v728
    %v763 = vmul.f32 %v416, %v732
    %v764 = vmul.f32 %v417, %v736
    %v765 = vmul.f32 %v418, %v740
    %v766 = vmul.f32 %v419, %v724
    %v767 = vmul.f32 %v420, %v728
    %v768 = vmul.f32 %v421, %v732
    %v769 = vmul.f32 %v422, %v736
    %v770 = vmul.f32 %v423, %v740
    %v771 = vmul.f32 %v424, %v724
    %v772 = vmul.f32 %v425, %v728
    %v773 = vmul.f32 %v426, %v732
    %v774 = vmul.f32 %v427, %v736
    %v775 = vmul.f32 %v428, %v740
    %v776 = vmul.f32 %v429, %v724
    %v777 = vmul.f32 %v430, %v728
    %v778 = vmul.f32 %v431, %v732
    %v779 = vmul.f32 %v432, %v736
    %v780 = vmul.f32 %v433, %v740
    %v781 = vmul.f32 %v434, %v724
    %v782 = vmul.f32 %v435, %v728
    %v783 = vmul.f32 %v436, %v732
    %v784 = vmul.f32 %v437, %v736
    %v785 = vmul.f32 %v438, %v740
    %v786 = vmul.f32 %v439, %v724
    %v787 = vmul.f32 %v440, %v728
    %v788 = vmul.f32 %v441, %v732
    %v789 = vmul.f32 %v442, %v736
    %v790 = vmul.f32 %v443, %v740
    %v791 = vmul.f32 %v444, %v724
    %v792 = vmul.f32 %v445, %v728
    %v793 = vmul.f32 %v446, %v732
    %v794 = vmul.f32 %v447, %v736
    %v795 = vmul.f32 %v448, %v740
    %v796 = vmul.f32 %v449, %v724
    %v797 = vmul.f32 %v450, %v728
    %v798 = vmul.f32 %v451, %v732
    %v799 = vmul.f32 %v452, %v736
    %v800 = vmul.f32 %v453, %v740
    %v801 = vmul.f32 %v454, %v724
    %v802 = vmul.f32 %v455, %v728
    %v803 = vmul.f32 %v456, %v732
    %v804 = vmul.f32 %v457, %v736
    %v805 = vmul.f32 %v458, %v740
    %v806 = vmul.f32 %v459, %v724
    %v807 = vmul.f32 %v460, %v728
    %v808 = vmul.f32 %v461, %v732
    %v809 = vmul.f32 %v462, %v736
    %v810 = vmul.f32 %v463, %v740
    %v811 = vmul.f32 %v464, %v724
    %v812 = vmul.f32 %v465, %v728
    %v813 = vmul.f32 %v466, %v732
    %v814 = vmul.f32 %v467, %v736
    %v815 = vmul.f32 %v468, %v740
    %v816 = vmul.f32 %v469, %v724
    %v817 = vmul.f32 %v470, %v728
    %v818 = vmul.f32 %v471, %v732
    %v819 = vmul.f32 %v472, %v736
    %v820 = vmul.f32 %v473, %v740
    %v821 = vmul.f32 %v474, %v724
    %v822 = vmul.f32 %v475, %v728
    %v823 = vmul.f32 %v476, %v732
    %v824 = vmul.f32 %v477, %v736
    %v825 = vmul.f32 %v478, %v740
    %v826 = vmul.f32 %v479, %v724
    %v827 = vmul.f32 %v480, %v728
    %v828 = vmul.f32 %v481, %v732
    %v829 = vmul.f32 %v482, %v736
    %v830 = vmul.f32 %v483, %v740
    %v831 = vmul.f32 %v484, %v724
    %v832 = vmul.f32 %v485, %v728
    %v833 = vmul.f32 %v486, %v732
    %v834 = vmul.f32 %v487, %v736
    %v835 = vmul.f32 %v488, %v740
    %v836 = vmul.f32 %v489, %v724
    %v837 = vmul.f32 %v490, %v728
    %v838 = vmul.f32 %v491, %v732
    %v839 = vmul.f32 %v492, %v736
    %v840 = vmul.f32 %v493, %v740
    %v841 = vmul.f32 %v494, %v724
    %v842 = vmul.f32 %v495, %v728
    %v843 = vmul.f32 %v496, %v732
    %v844 = vmul.f32 %v497, %v736
    %v845 = vmul.f32 %v498, %v740
    %v846 = vmul.f32 %v499, %v724
    %v847 = vmul.f32 %v500, %v728
    %v848 = vmul.f32 %v501, %v732
    %v849 = vmul.f32 %v502, %v736
    %v850 = vmul.f32 %v503, %v740
    %v851 = vmul.f32 %v504, %v724
    %v852 = vmul.f32 %v505, %v728
    %v853 = vmul.f32 %v506, %v732
    %v854 = vmul.f32 %v507, %v736
    %v855 = vmul.f32 %v508, %v740
    %v856 = vmul.f32 %v509, %v724
    %v857 = vmul.f32 %v510, %v728
    %v858 = vmul.f32 %v511, %v732
    %v859 = vmul.f32 %v512, %v736
    %v860 = vmul.f32 %v513, %v740
    %v861 = vmul.f32 %v514, %v724
    %v862 = vmul.f32 %v515, %v728
    %v863 = vmul.f32 %v516, %v732
    %v864 = vmul.f32 %v517, %v736
    %v865 = vmul.f32 %v518, %v740
    %v866 = vmul.f32 %v519, %v724
    %v867 = vmul.f32 %v520, %v728
    %v868 = vmul.f32 %v521, %v732
    %v869 = vmul.f32 %v522, %v736
    %v870 = vmul.f32 %v523, %v740
    %v871 = vmul.f32 %v524, %v724
    %v872 = vmul.f32 %v525, %v728
    %v873 = vmul.f32 %v526, %v732
    %v874 = vmul.f32 %v527, %v736
    %v875 = vmul.f32 %v528, %v740
    %v876 = vmul.f32 %v529, %v724
    %v877 = vmul.f32 %v530, %v728
    %v878 = vmul.f32 %v531, %v732
    %v879 = vmul.f32 %v532, %v736
    %v880 = vmul.f32 %v533, %v740
    %v881 = vmul.f32 %v534, %v724
    %v882 = vmul.f32 %v535, %v728
    %v883 = vmul.f32 %v536, %v732
    %v884 = vmul.f32 %v537, %v736
    %v885 = vmul.f32 %v538, %v740
    %v886 = vmul.f32 %v539, %v724
    %v887 = vmul.f32 %v540, %v728
    %v888 = vmul.f32 %v541, %v732
    %v889 = vmul.f32 %v542, %v736
    %v890 = vmul.f32 %v543, %v740
    %v891 = vmul.f32 %v544, %v724
    %v892 = vmul.f32 %v545, %v728
    %v893 = vmul.f32 %v546, %v732
    %v894 = vmul.f32 %v547, %v736
    %v895 = vmul.f32 %v548, %v740
    %v896 = vmul.f32 %v549, %v724
    %v897 = vmul.f32 %v550, %v728
    %v898 = vmul.f32 %v551, %v732
    %v899 = vmul.f32 %v552, %v736
    %v900 = vmul.f32 %v553, %v740
    %v901 = vmul.f32 %v554, %v724
    %v902 = vmul.f32 %v555, %v728
    %v903 = vmul.f32 %v556, %v732
    %v904 = vmul.f32 %v557, %v736
    %v905 = vmul.f32 %v558, %v740
    %v906 = vmul.f32 %v559, %v724
    %v907 = vmul.f32 %v560, %v728
    %v908 = vmul.f32 %v561, %v732
    %v909 = vmul.f32 %v562, %v736
    %v910 = vmul.f32 %v563, %v740
    %v911 = vmul.f32 %v564, %v724
    %v912 = vmul.f32 %v565, %v728
    %v913 = vmul.f32 %v566, %v732
    %v914 = vmul.f32 %v567, %v736
    %v915 = vmul.f32 %v568, %v740
    %v916 = vmul.f32 %v569, %v724
    %v917 = vmul.f32 %v570, %v728
    %v918 = vmul.f32 %v571, %v732
    %v919 = vmul.f32 %v572, %v736
    %v920 = vmul.f32 %v573, %v740
    %v921 = vmul.f32 %v574, %v724
    %v922 = vmul.f32 %v575, %v728
    %v923 = vmul.f32 %v576, %v732
    %v924 = vmul.f32 %v577, %v736
    %v925 = vmul.f32 %v578, %v740
    %v926 = vmul.f32 %v579, %v724
    %v927 = vmul.f32 %v580, %v728
    %v928 = vmul.f32 %v581, %v732
    %v929 = vmul.f32 %v582, %v736
    %v930 = vmul.f32 %v583, %v740
    %v931 = vmul.f32 %v584, %v724
    %v932 = vmul.f32 %v585, %v728
    %v933 = vmul.f32 %v586, %v732
    %v934 = vmul.f32 %v587, %v736
    %v935 = vmul.f32 %v588, %v740
    %v936 = vmul.f32 %v589, %v724
    %v937 = vmul.f32 %v590, %v728
    %v938 = vmul.f32 %v591, %v732
    %v939 = vmul.f32 %v592, %v736
    %v940 = vmul.f32 %v593, %v740
    %v941 = vmul.f32 %v594, %v724
    %v942 = vmul.f32 %v595, %v728
    %v943 = vmul.f32 %v596, %v732
    %v944 = vmul.f32 %v597, %v736
    %v945 = vmul.f32 %v598, %v740
    %v946 = vmul.f32 %v599, %v724
    %v947 = vmul.f32 %v600, %v728
    %v948 = vmul.f32 %v601, %v732
    %v949 = vmul.f32 %v602, %v736
    %v950 = vmul.f32 %v603, %v740
    %v951 = vmul.f32 %v604, %v724
    %v952 = vmul.f32 %v605, %v728
    %v953 = vmul.f32 %v606, %v732
    %v954 = vmul.f32 %v607, %v736
    %v955 = vmul.f32 %v608, %v740
    %v956 = vmul.f32 %v609, %v724
    %v957 = vmul.f32 %v610, %v728
    %v958 = vmul.f32 %v611, %v732
    %v959 = vmul.f32 %v612, %v736
    %v960 = vmul.f32 %v613, %v740
    %v961 = vmul.f32 %v614, %v724
    %v962 = vmul.f32 %v615, %v728
    %v963 = vmul.f32 %v616, %v732
    %v964 = vmul.f32 %v617, %v736
    %v965 = vmul.f32 %v618, %v740
    %v966 = vmul.f32 %v619, %v724
    %v967 = vmul.f32 %v620, %v728
    %v968 = vmul.f32 %v621, %v732
    %v969 = vmul.f32 %v622, %v736
    %v970 = vmul.f32 %v623, %v740
    %v971 = vmul.f32 %v624, %v724
    %v972 = vmul.f32 %v625, %v728
    %v973 = vmul.f32 %v626, %v732
    %v974 = vmul.f32 %v627, %v736
    %v975 = vmul.f32 %v628, %v740
    %v976 = vmul.f32 %v629, %v724
    %v977 = vmul.f32 %v630, %v728
    %v978 = vmul.f32 %v631, %v732
    %v979 = vmul.f32 %v632, %v736
    %v980 = vmul.f32 %v633, %v740
    %v981 = vmul.f32 %v634, %v724
    %v982 = vmul.f32 %v635, %v728
    %v983 = vmul.f32 %v636, %v732
    %v984 = vmul.f32 %v637, %v736
    %v985 = vmul.f32 %v638, %v740
    %v986 = vmul.f32 %v639, %v724
    %v987 = vmul.f32 %v640, %v728
    %v988 = vmul.f32 %v641, %v732
    %v989 = vmul.f32 %v642, %v736
    %v990 = vmul.f32 %v643, %v740
    %v991 = vmul.f32 %v644, %v724
    %v992 = vmul.f32 %v645, %v728
    %v993 = vmul.f32 %v646, %v732
    %v994 = vmul.f32 %v647, %v736
    %v995 = vmul.f32 %v648, %v740
    %v996 = vmul.f32 %v649, %v724
    %v997 = vmul.f32 %v650, %v728
    %v998 = vmul.f32 %v651, %v732
    %v999 = vmul.f32 %v652, %v736
    %v1000 = vmul.f32 %v653, %v740
    %v1001 = vmul.f32 %v654, %v724
    %v1002 = vmul.f32 %v655, %v728
    %v1003 = vmul.f32 %v656, %v732
    %v1004 = vmul.f32 %v657, %v736
    %v1005 = vmul.f32 %v658, %v740
    %v1006 = vmul.f32 %v659, %v724
    %v1007 = vmul.f32 %v660, %v728
    %v1008 = vmul.f32 %v661, %v732
    %v1009 = vmul.f32 %v662, %v736
    %v1010 = vmul.f32 %v663, %v740
    %v1011 = vmul.f32 %v664, %v724
    %v1012 = vmul.f32 %v665, %v728
    %v1013 = vmul.f32 %v666, %v732
    %v1014 = vmul.f32 %v667, %v736
    %v1015 = vmul.f32 %v668, %v740
    %v1016 = vmul.f32 %v669, %v724
    %v1017 = vmul.f32 %v670, %v728
    %v1018 = vmul.f32 %v671, %v732
    %v1019 = vmul.f32 %v672, %v736
    %v1020 = vmul.f32 %v673, %v740
    %v1021 = vmul.f32 %v674, %v724
    %v1022 = vmul.f32 %v675, %v728
    %v1023 = vmul.f32 %v676, %v732
    %v1024 = vmul.f32 %v677, %v736
    %v1025 = vmul.f32 %v678, %v740
    %v1026 = vmul.f32 %v679, %v724
    %v1027 = vmul.f32 %v680, %v728
    %v1028 = vmul.f32 %v681, %v732
    %v1029 = vmul.f32 %v682, %v736
    %v1030 = vmul.f32 %v683, %v740
    %v1031 = vmul.f32 %v684, %v724
    %v1032 = vmul.f32 %v685, %v728
    %v1033 = vmul.f32 %v686, %v732
    %v1034 = vmul.f32 %v687, %v736
    %v1035 = vmul.f32 %v688, %v740
    %v1036 = vmul.f32 %v689, %v724
    %v1037 = vmul.f32 %v690, %v728
    %v1038 = vmul.f32 %v691, %v732
    %v1039 = vmul.f32 %v692, %v736
    %v1040 = vmul.f32 %v693, %v740
    %v1041 = vmul.f32 %v694, %v724
    %v1042 = vmul.f32 %v695, %v728
    %v1043 = vmul.f32 %v696, %v732
    %v1044 = vmul.f32 %v697, %v736
    %v1045 = vmul.f32 %v698, %v740
    %v1046 = vmul.f32 %v699, %v724
    %v1047 = vmul.f32 %v700, %v728
    %v1048 = vmul.f32 %v701, %v732
    %v1049 = vmul.f32 %v702, %v736
    %v1050 = vmul.f32 %v703, %v740
    %v1051 = vmul.f32 %v704, %v724
    %v1052 = vmul.f32 %v705, %v728
    %v1053 = vmul.f32 %v706, %v732
    %v1054 = vmul.f32 %v707, %v736
    %v1055 = vmul.f32 %v708, %v740
    %v1056 = vmul.f32 %v709, %v724
    %v1057 = vmul.f32 %v710, %v728
    %v1058 = vmul.f32 %v711, %v732
    %v1059 = vmul.f32 %v712, %v736
    %v1060 = vmul.f32 %v713, %v740
    %v1061 = vmul.f32 %v714, %v724
    %v1062 = vmul.f32 %v715, %v728
    %v1063 = vmul.f32 %v716, %v732
    %v1064 = vmul.f32 %v717, %v736
    %v1065 = vmul.f32 %v718, %v740
    %1066 = vst [vmem:[#allocation8] sm:$0xff] %v746
    %1067 = vst [vmem:[#allocation8 + $0x8] sm:$0xff] %v747
    %1068 = vst [vmem:[#allocation8 + $0x10] sm:$0xff] %v748
    %1069 = vst [vmem:[#allocation8 + $0x18] sm:$0xff] %v749
    %1070 = vst [vmem:[#allocation8 + $0x20] sm:$0xff] %v750
    %1071 = vst [vmem:[#allocation8 + $0x28] sm:$0xff] %v751
    %1072 = vst [vmem:[#allocation8 + $0x30] sm:$0xff] %v752
    %1073 = vst [vmem:[#allocation8 + $0x38] sm:$0xff] %v753
    %1074 = vst [vmem:[#allocation8 + $0x40] sm:$0xff] %v754
    %1075 = vst [vmem:[#allocation8 + $0x48] sm:$0xff] %v755
    %1076 = vst [vmem:[#allocation8 + $0x50] sm:$0xff] %v756
    %1077 = vst [vmem:[#allocation8 + $0x58] sm:$0xff] %v757
    %1078 = vst [vmem:[#allocation8 + $0x60] sm:$0xff] %v758
    %1079 = vst [vmem:[#allocation8 + $0x68] sm:$0xff] %v759
    %1080 = vst [vmem:[#allocation8 + $0x70] sm:$0xff] %v760
    %1081 = vst [vmem:[#allocation8 + $0x78] sm:$0xff] %v761
    %1082 = vst [vmem:[#allocation8 + $0x80] sm:$0xff] %v762
    %1083 = vst [vmem:[#allocation8 + $0x88] sm:$0xff] %v763
    %1084 = vst [vmem:[#allocation8 + $0x90] sm:$0xff] %v764
    %1085 = vst [vmem:[#allocation8 + $0x98] sm:$0xff] %v765
    %1086 = vst [vmem:[#allocation8 + $0xa0] sm:$0xff] %v766
    %1087 = vst [vmem:[#allocation8 + $0xa8] sm:$0xff] %v767
    %1088 = vst [vmem:[#allocation8 + $0xb0] sm:$0xff] %v768
    %1089 = vst [vmem:[#allocation8 + $0xb8] sm:$0xff] %v769
    %1090 = vst [vmem:[#allocation8 + $0xc0] sm:$0xff] %v770
    %1091 = vst [vmem:[#allocation8 + $0xc8] sm:$0xff] %v771
    %1092 = vst [vmem:[#allocation8 + $0xd0] sm:$0xff] %v772
    %1093 = vst [vmem:[#allocation8 + $0xd8] sm:$0xff] %v773
    %1094 = vst [vmem:[#allocation8 + $0xe0] sm:$0xff] %v774
    %1095 = vst [vmem:[#allocation8 + $0xe8] sm:$0xff] %v775
    %1096 = vst [vmem:[#allocation8 + $0xf0] sm:$0xff] %v776
    %1097 = vst [vmem:[#allocation8 + $0xf8] sm:$0xff] %v777
    %1098 = vst [vmem:[#allocation8 + $0x100] sm:$0xff] %v778
    %1099 = vst [vmem:[#allocation8 + $0x108] sm:$0xff] %v779
    %1100 = vst [vmem:[#allocation8 + $0x110] sm:$0xff] %v780
    %1101 = vst [vmem:[#allocation8 + $0x118] sm:$0xff] %v781
    %1102 = vst [vmem:[#allocation8 + $0x120] sm:$0xff] %v782
    %1103 = vst [vmem:[#allocation8 + $0x128] sm:$0xff] %v783
    %1104 = vst [vmem:[#allocation8 + $0x130] sm:$0xff] %v784
    %1105 = vst [vmem:[#allocation8 + $0x138] sm:$0xff] %v785
    %1106 = vst [vmem:[#allocation8 + $0x140] sm:$0xff] %v786
    %1107 = vst [vmem:[#allocation8 + $0x148] sm:$0xff] %v787
    %1108 = vst [vmem:[#allocation8 + $0x150] sm:$0xff] %v788
    %1109 = vst [vmem:[#allocation8 + $0x158] sm:$0xff] %v789
    %1110 = vst [vmem:[#allocation8 + $0x160] sm:$0xff] %v790
    %1111 = vst [vmem:[#allocation8 + $0x168] sm:$0xff] %v791
    %1112 = vst [vmem:[#allocation8 + $0x170] sm:$0xff] %v792
    %1113 = vst [vmem:[#allocation8 + $0x178] sm:$0xff] %v793
    %1114 = vst [vmem:[#allocation8 + $0x180] sm:$0xff] %v794
    %1115 = vst [vmem:[#allocation8 + $0x188] sm:$0xff] %v795
    %1116 = vst [vmem:[#allocation8 + $0x190] sm:$0xff] %v796
    %1117 = vst [vmem:[#allocation8 + $0x198] sm:$0xff] %v797
    %1118 = vst [vmem:[#allocation8 + $0x1a0] sm:$0xff] %v798
    %1119 = vst [vmem:[#allocation8 + $0x1a8] sm:$0xff] %v799
    %1120 = vst [vmem:[#allocation8 + $0x1b0] sm:$0xff] %v800
    %1121 = vst [vmem:[#allocation8 + $0x1b8] sm:$0xff] %v801
    %1122 = vst [vmem:[#allocation8 + $0x1c0] sm:$0xff] %v802
    %1123 = vst [vmem:[#allocation8 + $0x1c8] sm:$0xff] %v803
    %1124 = vst [vmem:[#allocation8 + $0x1d0] sm:$0xff] %v804
    %1125 = vst [vmem:[#allocation8 + $0x1d8] sm:$0xff] %v805
    %1126 = vst [vmem:[#allocation8 + $0x1e0] sm:$0xff] %v806
    %1127 = vst [vmem:[#allocation8 + $0x1e8] sm:$0xff] %v807
    %1128 = vst [vmem:[#allocation8 + $0x1f0] sm:$0xff] %v808
    %1129 = vst [vmem:[#allocation8 + $0x1f8] sm:$0xff] %v809
    %1130 = vst [vmem:[#allocation8 + $0x200] sm:$0xff] %v810
    %1131 = vst [vmem:[#allocation8 + $0x208] sm:$0xff] %v811
    %1132 = vst [vmem:[#allocation8 + $0x210] sm:$0xff] %v812
    %1133 = vst [vmem:[#allocation8 + $0x218] sm:$0xff] %v813
    %1134 = vst [vmem:[#allocation8 + $0x220] sm:$0xff] %v814
    %1135 = vst [vmem:[#allocation8 + $0x228] sm:$0xff] %v815
    %1136 = vst [vmem:[#allocation8 + $0x230] sm:$0xff] %v816
    %1137 = vst [vmem:[#allocation8 + $0x238] sm:$0xff] %v817
    %1138 = vst [vmem:[#allocation8 + $0x240] sm:$0xff] %v818
    %1139 = vst [vmem:[#allocation8 + $0x248] sm:$0xff] %v819
    %1140 = vst [vmem:[#allocation8 + $0x250] sm:$0xff] %v820
    %1141 = vst [vmem:[#allocation8 + $0x258] sm:$0xff] %v821
    %1142 = vst [vmem:[#allocation8 + $0x260] sm:$0xff] %v822
    %1143 = vst [vmem:[#allocation8 + $0x268] sm:$0xff] %v823
    %1144 = vst [vmem:[#allocation8 + $0x270] sm:$0xff] %v824
    %1145 = vst [vmem:[#allocation8 + $0x278] sm:$0xff] %v825
    %1146 = vst [vmem:[#allocation8 + $0x280] sm:$0xff] %v826
    %1147 = vst [vmem:[#allocation8 + $0x288] sm:$0xff] %v827
    %1148 = vst [vmem:[#allocation8 + $0x290] sm:$0xff] %v828
    %1149 = vst [vmem:[#allocation8 + $0x298] sm:$0xff] %v829
    %1150 = vst [vmem:[#allocation8 + $0x2a0] sm:$0xff] %v830
    %1151 = vst [vmem:[#allocation8 + $0x2a8] sm:$0xff] %v831
    %1152 = vst [vmem:[#allocation8 + $0x2b0] sm:$0xff] %v832
    %1153 = vst [vmem:[#allocation8 + $0x2b8] sm:$0xff] %v833
    %1154 = vst [vmem:[#allocation8 + $0x2c0] sm:$0xff] %v834
    %1155 = vst [vmem:[#allocation8 + $0x2c8] sm:$0xff] %v835
    %1156 = vst [vmem:[#allocation8 + $0x2d0] sm:$0xff] %v836
    %1157 = vst [vmem:[#allocation8 + $0x2d8] sm:$0xff] %v837
    %1158 = vst [vmem:[#allocation8 + $0x2e0] sm:$0xff] %v838
    %1159 = vst [vmem:[#allocation8 + $0x2e8] sm:$0xff] %v839
    %1160 = vst [vmem:[#allocation8 + $0x2f0] sm:$0xff] %v840
    %1161 = vst [vmem:[#allocation8 + $0x2f8] sm:$0xff] %v841
    %1162 = vst [vmem:[#allocation8 + $0x300] sm:$0xff] %v842
    %1163 = vst [vmem:[#allocation8 + $0x308] sm:$0xff] %v843
    %1164 = vst [vmem:[#allocation8 + $0x310] sm:$0xff] %v844
    %1165 = vst [vmem:[#allocation8 + $0x318] sm:$0xff] %v845
    %1166 = vst [vmem:[#allocation8 + $0x320] sm:$0xff] %v846
    %1167 = vst [vmem:[#allocation8 + $0x328] sm:$0xff] %v847
    %1168 = vst [vmem:[#allocation8 + $0x330] sm:$0xff] %v848
    %1169 = vst [vmem:[#allocation8 + $0x338] sm:$0xff] %v849
    %1170 = vst [vmem:[#allocation8 + $0x340] sm:$0xff] %v850
    %1171 = vst [vmem:[#allocation8 + $0x348] sm:$0xff] %v851
    %1172 = vst [vmem:[#allocation8 + $0x350] sm:$0xff] %v852
    %1173 = vst [vmem:[#allocation8 + $0x358] sm:$0xff] %v853
    %1174 = vst [vmem:[#allocation8 + $0x360] sm:$0xff] %v854
    %1175 = vst [vmem:[#allocation8 + $0x368] sm:$0xff] %v855
    %1176 = vst [vmem:[#allocation8 + $0x370] sm:$0xff] %v856
    %1177 = vst [vmem:[#allocation8 + $0x378] sm:$0xff] %v857
    %1178 = vst [vmem:[#allocation8 + $0x380] sm:$0xff] %v858
    %1179 = vst [vmem:[#allocation8 + $0x388] sm:$0xff] %v859
    %1180 = vst [vmem:[#allocation8 + $0x390] sm:$0xff] %v860
    %1181 = vst [vmem:[#allocation8 + $0x398] sm:$0xff] %v861
    %1182 = vst [vmem:[#allocation8 + $0x3a0] sm:$0xff] %v862
    %1183 = vst [vmem:[#allocation8 + $0x3a8] sm:$0xff] %v863
    %1184 = vst [vmem:[#allocation8 + $0x3b0] sm:$0xff] %v864
    %1185 = vst [vmem:[#allocation8 + $0x3b8] sm:$0xff] %v865
    %1186 = vst [vmem:[#allocation8 + $0x3c0] sm:$0xff] %v866
    %1187 = vst [vmem:[#allocation8 + $0x3c8] sm:$0xff] %v867
    %1188 = vst [vmem:[#allocation8 + $0x3d0] sm:$0xff] %v868
    %1189 = vst [vmem:[#allocation8 + $0x3d8] sm:$0xff] %v869
    %1190 = vst [vmem:[#allocation8 + $0x3e0] sm:$0xff] %v870
    %1191 = vst [vmem:[#allocation8 + $0x3e8] sm:$0xff] %v871
    %1192 = vst [vmem:[#allocation8 + $0x3f0] sm:$0xff] %v872
    %1193 = vst [vmem:[#allocation8 + $0x3f8] sm:$0xff] %v873
    %1194 = vst [vmem:[#allocation8 + $0x400] sm:$0xff] %v874
    %1195 = vst [vmem:[#allocation8 + $0x408] sm:$0xff] %v875
    %1196 = vst [vmem:[#allocation8 + $0x410] sm:$0xff] %v876
    %1197 = vst [vmem:[#allocation8 + $0x418] sm:$0xff] %v877
    %1198 = vst [vmem:[#allocation8 + $0x420] sm:$0xff] %v878
    %1199 = vst [vmem:[#allocation8 + $0x428] sm:$0xff] %v879
    %1200 = vst [vmem:[#allocation8 + $0x430] sm:$0xff] %v880
    %1201 = vst [vmem:[#allocation8 + $0x438] sm:$0xff] %v881
    %1202 = vst [vmem:[#allocation8 + $0x440] sm:$0xff] %v882
    %1203 = vst [vmem:[#allocation8 + $0x448] sm:$0xff] %v883
    %1204 = vst [vmem:[#allocation8 + $0x450] sm:$0xff] %v884
    %1205 = vst [vmem:[#allocation8 + $0x458] sm:$0xff] %v885
    %1206 = vst [vmem:[#allocation8 + $0x460] sm:$0xff] %v886
    %1207 = vst [vmem:[#allocation8 + $0x468] sm:$0xff] %v887
    %1208 = vst [vmem:[#allocation8 + $0x470] sm:$0xff] %v888
    %1209 = vst [vmem:[#allocation8 + $0x478] sm:$0xff] %v889
    %1210 = vst [vmem:[#allocation8 + $0x480] sm:$0xff] %v890
    %1211 = vst [vmem:[#allocation8 + $0x488] sm:$0xff] %v891
    %1212 = vst [vmem:[#allocation8 + $0x490] sm:$0xff] %v892
    %1213 = vst [vmem:[#allocation8 + $0x498] sm:$0xff] %v893
    %1214 = vst [vmem:[#allocation8 + $0x4a0] sm:$0xff] %v894
    %1215 = vst [vmem:[#allocation8 + $0x4a8] sm:$0xff] %v895
    %1216 = vst [vmem:[#allocation8 + $0x4b0] sm:$0xff] %v896
    %1217 = vst [vmem:[#allocation8 + $0x4b8] sm:$0xff] %v897
    %1218 = vst [vmem:[#allocation8 + $0x4c0] sm:$0xff] %v898
    %1219 = vst [vmem:[#allocation8 + $0x4c8] sm:$0xff] %v899
    %1220 = vst [vmem:[#allocation8 + $0x4d0] sm:$0xff] %v900
    %1221 = vst [vmem:[#allocation8 + $0x4d8] sm:$0xff] %v901
    %1222 = vst [vmem:[#allocation8 + $0x4e0] sm:$0xff] %v902
    %1223 = vst [vmem:[#allocation8 + $0x4e8] sm:$0xff] %v903
    %1224 = vst [vmem:[#allocation8 + $0x4f0] sm:$0xff] %v904
    %1225 = vst [vmem:[#allocation8 + $0x4f8] sm:$0xff] %v905
    %1226 = vst [vmem:[#allocation8 + $0x500] sm:$0xff] %v906
    %1227 = vst [vmem:[#allocation8 + $0x508] sm:$0xff] %v907
    %1228 = vst [vmem:[#allocation8 + $0x510] sm:$0xff] %v908
    %1229 = vst [vmem:[#allocation8 + $0x518] sm:$0xff] %v909
    %1230 = vst [vmem:[#allocation8 + $0x520] sm:$0xff] %v910
    %1231 = vst [vmem:[#allocation8 + $0x528] sm:$0xff] %v911
    %1232 = vst [vmem:[#allocation8 + $0x530] sm:$0xff] %v912
    %1233 = vst [vmem:[#allocation8 + $0x538] sm:$0xff] %v913
    %1234 = vst [vmem:[#allocation8 + $0x540] sm:$0xff] %v914
    %1235 = vst [vmem:[#allocation8 + $0x548] sm:$0xff] %v915
    %1236 = vst [vmem:[#allocation8 + $0x550] sm:$0xff] %v916
    %1237 = vst [vmem:[#allocation8 + $0x558] sm:$0xff] %v917
    %1238 = vst [vmem:[#allocation8 + $0x560] sm:$0xff] %v918
    %1239 = vst [vmem:[#allocation8 + $0x568] sm:$0xff] %v919
    %1240 = vst [vmem:[#allocation8 + $0x570] sm:$0xff] %v920
    %1241 = vst [vmem:[#allocation8 + $0x578] sm:$0xff] %v921
    %1242 = vst [vmem:[#allocation8 + $0x580] sm:$0xff] %v922
    %1243 = vst [vmem:[#allocation8 + $0x588] sm:$0xff] %v923
    %1244 = vst [vmem:[#allocation8 + $0x590] sm:$0xff] %v924
    %1245 = vst [vmem:[#allocation8 + $0x598] sm:$0xff] %v925
    %1246 = vst [vmem:[#allocation8 + $0x5a0] sm:$0xff] %v926
    %1247 = vst [vmem:[#allocation8 + $0x5a8] sm:$0xff] %v927
    %1248 = vst [vmem:[#allocation8 + $0x5b0] sm:$0xff] %v928
    %1249 = vst [vmem:[#allocation8 + $0x5b8] sm:$0xff] %v929
    %1250 = vst [vmem:[#allocation8 + $0x5c0] sm:$0xff] %v930
    %1251 = vst [vmem:[#allocation8 + $0x5c8] sm:$0xff] %v931
    %1252 = vst [vmem:[#allocation8 + $0x5d0] sm:$0xff] %v932
    %1253 = vst [vmem:[#allocation8 + $0x5d8] sm:$0xff] %v933
    %1254 = vst [vmem:[#allocation8 + $0x5e0] sm:$0xff] %v934
    %1255 = vst [vmem:[#allocation8 + $0x5e8] sm:$0xff] %v935
    %1256 = vst [vmem:[#allocation8 + $0x5f0] sm:$0xff] %v936
    %1257 = vst [vmem:[#allocation8 + $0x5f8] sm:$0xff] %v937
    %1258 = vst [vmem:[#allocation8 + $0x600] sm:$0xff] %v938
    %1259 = vst [vmem:[#allocation8 + $0x608] sm:$0xff] %v939
    %1260 = vst [vmem:[#allocation8 + $0x610] sm:$0xff] %v940
    %1261 = vst [vmem:[#allocation8 + $0x618] sm:$0xff] %v941
    %1262 = vst [vmem:[#allocation8 + $0x620] sm:$0xff] %v942
    %1263 = vst [vmem:[#allocation8 + $0x628] sm:$0xff] %v943
    %1264 = vst [vmem:[#allocation8 + $0x630] sm:$0xff] %v944
    %1265 = vst [vmem:[#allocation8 + $0x638] sm:$0xff] %v945
    %1266 = vst [vmem:[#allocation8 + $0x640] sm:$0xff] %v946
    %1267 = vst [vmem:[#allocation8 + $0x648] sm:$0xff] %v947
    %1268 = vst [vmem:[#allocation8 + $0x650] sm:$0xff] %v948
    %1269 = vst [vmem:[#allocation8 + $0x658] sm:$0xff] %v949
    %1270 = vst [vmem:[#allocation8 + $0x660] sm:$0xff] %v950
    %1271 = vst [vmem:[#allocation8 + $0x668] sm:$0xff] %v951
    %1272 = vst [vmem:[#allocation8 + $0x670] sm:$0xff] %v952
    %1273 = vst [vmem:[#allocation8 + $0x678] sm:$0xff] %v953
    %1274 = vst [vmem:[#allocation8 + $0x680] sm:$0xff] %v954
    %1275 = vst [vmem:[#allocation8 + $0x688] sm:$0xff] %v955
    %1276 = vst [vmem:[#allocation8 + $0x690] sm:$0xff] %v956
    %1277 = vst [vmem:[#allocation8 + $0x698] sm:$0xff] %v957
    %1278 = vst [vmem:[#allocation8 + $0x6a0] sm:$0xff] %v958
    %1279 = vst [vmem:[#allocation8 + $0x6a8] sm:$0xff] %v959
    %1280 = vst [vmem:[#allocation8 + $0x6b0] sm:$0xff] %v960
    %1281 = vst [vmem:[#allocation8 + $0x6b8] sm:$0xff] %v961
    %1282 = vst [vmem:[#allocation8 + $0x6c0] sm:$0xff] %v962
    %1283 = vst [vmem:[#allocation8 + $0x6c8] sm:$0xff] %v963
    %1284 = vst [vmem:[#allocation8 + $0x6d0] sm:$0xff] %v964
    %1285 = vst [vmem:[#allocation8 + $0x6d8] sm:$0xff] %v965
    %1286 = vst [vmem:[#allocation8 + $0x6e0] sm:$0xff] %v966
    %1287 = vst [vmem:[#allocation8 + $0x6e8] sm:$0xff] %v967
    %1288 = vst [vmem:[#allocation8 + $0x6f0] sm:$0xff] %v968
    %1289 = vst [vmem:[#allocation8 + $0x6f8] sm:$0xff] %v969
    %1290 = vst [vmem:[#allocation8 + $0x700] sm:$0xff] %v970
    %1291 = vst [vmem:[#allocation8 + $0x708] sm:$0xff] %v971
    %1292 = vst [vmem:[#allocation8 + $0x710] sm:$0xff] %v972
    %1293 = vst [vmem:[#allocation8 + $0x718] sm:$0xff] %v973
    %1294 = vst [vmem:[#allocation8 + $0x720] sm:$0xff] %v974
    %1295 = vst [vmem:[#allocation8 + $0x728] sm:$0xff] %v975
    %1296 = vst [vmem:[#allocation8 + $0x730] sm:$0xff] %v976
    %1297 = vst [vmem:[#allocation8 + $0x738] sm:$0xff] %v977
    %1298 = vst [vmem:[#allocation8 + $0x740] sm:$0xff] %v978
    %1299 = vst [vmem:[#allocation8 + $0x748] sm:$0xff] %v979
    %1300 = vst [vmem:[#allocation8 + $0x750] sm:$0xff] %v980
    %1301 = vst [vmem:[#allocation8 + $0x758] sm:$0xff] %v981
    %1302 = vst [vmem:[#allocation8 + $0x760] sm:$0xff] %v982
    %1303 = vst [vmem:[#allocation8 + $0x768] sm:$0xff] %v983
    %1304 = vst [vmem:[#allocation8 + $0x770] sm:$0xff] %v984
    %1305 = vst [vmem:[#allocation8 + $0x778] sm:$0xff] %v985
    %1306 = vst [vmem:[#allocation8 + $0x780] sm:$0xff] %v986
    %1307 = vst [vmem:[#allocation8 + $0x788] sm:$0xff] %v987
    %1308 = vst [vmem:[#allocation8 + $0x790] sm:$0xff] %v988
    %1309 = vst [vmem:[#allocation8 + $0x798] sm:$0xff] %v989
    %1310 = vst [vmem:[#allocation8 + $0x7a0] sm:$0xff] %v990
    %1311 = vst [vmem:[#allocation8 + $0x7a8] sm:$0xff] %v991
    %1312 = vst [vmem:[#allocation8 + $0x7b0] sm:$0xff] %v992
    %1313 = vst [vmem:[#allocation8 + $0x7b8] sm:$0xff] %v993
    %1314 = vst [vmem:[#allocation8 + $0x7c0] sm:$0xff] %v994
    %1315 = vst [vmem:[#allocation8 + $0x7c8] sm:$0xff] %v995
    %1316 = vst [vmem:[#allocation8 + $0x7d0] sm:$0xff] %v996
    %1317 = vst [vmem:[#allocation8 + $0x7d8] sm:$0xff] %v997
    %1318 = vst [vmem:[#allocation8 + $0x7e0] sm:$0xff] %v998
    %1319 = vst [vmem:[#allocation8 + $0x7e8] sm:$0xff] %v999
    %1320 = vst [vmem:[#allocation8 + $0x7f0] sm:$0xff] %v1000
    %1321 = vst [vmem:[#allocation8 + $0x7f8] sm:$0xff] %v1001
    %1322 = vst [vmem:[#allocation8 + $0x800] sm:$0xff] %v1002
    %1323 = vst [vmem:[#allocation8 + $0x808] sm:$0xff] %v1003
    %1324 = vst [vmem:[#allocation8 + $0x810] sm:$0xff] %v1004
    %1325 = vst [vmem:[#allocation8 + $0x818] sm:$0xff] %v1005
    %1326 = vst [vmem:[#allocation8 + $0x820] sm:$0xff] %v1006
    %1327 = vst [vmem:[#allocation8 + $0x828] sm:$0xff] %v1007
    %1328 = vst [vmem:[#allocation8 + $0x830] sm:$0xff] %v1008
    %1329 = vst [vmem:[#allocation8 + $0x838] sm:$0xff] %v1009
    %1330 = vst [vmem:[#allocation8 + $0x840] sm:$0xff] %v1010
    %1331 = vst [vmem:[#allocation8 + $0x848] sm:$0xff] %v1011
    %1332 = vst [vmem:[#allocation8 + $0x850] sm:$0xff] %v1012
    %1333 = vst [vmem:[#allocation8 + $0x858] sm:$0xff] %v1013
    %1334 = vst [vmem:[#allocation8 + $0x860] sm:$0xff] %v1014
    %1335 = vst [vmem:[#allocation8 + $0x868] sm:$0xff] %v1015
    %1336 = vst [vmem:[#allocation8 + $0x870] sm:$0xff] %v1016
    %1337 = vst [vmem:[#allocation8 + $0x878] sm:$0xff] %v1017
    %1338 = vst [vmem:[#allocation8 + $0x880] sm:$0xff] %v1018
    %1339 = vst [vmem:[#allocation8 + $0x888] sm:$0xff] %v1019
    %1340 = vst [vmem:[#allocation8 + $0x890] sm:$0xff] %v1020
    %1341 = vst [vmem:[#allocation8 + $0x898] sm:$0xff] %v1021
    %1342 = vst [vmem:[#allocation8 + $0x8a0] sm:$0xff] %v1022
    %1343 = vst [vmem:[#allocation8 + $0x8a8] sm:$0xff] %v1023
    %1344 = vst [vmem:[#allocation8 + $0x8b0] sm:$0xff] %v1024
    %1345 = vst [vmem:[#allocation8 + $0x8b8] sm:$0xff] %v1025
    %1346 = vst [vmem:[#allocation8 + $0x8c0] sm:$0xff] %v1026
    %1347 = vst [vmem:[#allocation8 + $0x8c8] sm:$0xff] %v1027
    %1348 = vst [vmem:[#allocation8 + $0x8d0] sm:$0xff] %v1028
    %1349 = vst [vmem:[#allocation8 + $0x8d8] sm:$0xff] %v1029
    %1350 = vst [vmem:[#allocation8 + $0x8e0] sm:$0xff] %v1030
    %1351 = vst [vmem:[#allocation8 + $0x8e8] sm:$0xff] %v1031
    %1352 = vst [vmem:[#allocation8 + $0x8f0] sm:$0xff] %v1032
    %1353 = vst [vmem:[#allocation8 + $0x8f8] sm:$0xff] %v1033
    %1354 = vst [vmem:[#allocation8 + $0x900] sm:$0xff] %v1034
    %1355 = vst [vmem:[#allocation8 + $0x908] sm:$0xff] %v1035
    %1356 = vst [vmem:[#allocation8 + $0x910] sm:$0xff] %v1036
    %1357 = vst [vmem:[#allocation8 + $0x918] sm:$0xff] %v1037
    %1358 = vst [vmem:[#allocation8 + $0x920] sm:$0xff] %v1038
    %1359 = vst [vmem:[#allocation8 + $0x928] sm:$0xff] %v1039
    %1360 = vst [vmem:[#allocation8 + $0x930] sm:$0xff] %v1040
    %1361 = vst [vmem:[#allocation8 + $0x938] sm:$0xff] %v1041
    %1362 = vst [vmem:[#allocation8 + $0x940] sm:$0xff] %v1042
    %1363 = vst [vmem:[#allocation8 + $0x948] sm:$0xff] %v1043
    %1364 = vst [vmem:[#allocation8 + $0x950] sm:$0xff] %v1044
    %1365 = vst [vmem:[#allocation8 + $0x958] sm:$0xff] %v1045
    %1366 = vst [vmem:[#allocation8 + $0x960] sm:$0xff] %v1046
    %1367 = vst [vmem:[#allocation8 + $0x968] sm:$0xff] %v1047
    %1368 = vst [vmem:[#allocation8 + $0x970] sm:$0xff] %v1048
    %1369 = vst [vmem:[#allocation8 + $0x978] sm:$0xff] %v1049
    %1370 = vst [vmem:[#allocation8 + $0x980] sm:$0xff] %v1050
    %1371 = vst [vmem:[#allocation8 + $0x988] sm:$0xff] %v1051
    %1372 = vst [vmem:[#allocation8 + $0x990] sm:$0xff] %v1052
    %1373 = vst [vmem:[#allocation8 + $0x998] sm:$0xff] %v1053
    %1374 = vst [vmem:[#allocation8 + $0x9a0] sm:$0xff] %v1054
    %1375 = vst [vmem:[#allocation8 + $0x9a8] sm:$0xff] %v1055
    %1376 = vst [vmem:[#allocation8 + $0x9b0] sm:$0xff] %v1056
    %1377 = vst [vmem:[#allocation8 + $0x9b8] sm:$0xff] %v1057
    %1378 = vst [vmem:[#allocation8 + $0x9c0] sm:$0xff] %v1058
    %1379 = vst [vmem:[#allocation8 + $0x9c8] sm:$0xff] %v1059
    %1380 = vst [vmem:[#allocation8 + $0x9d0] sm:$0xff] %v1060
    %1381 = vst [vmem:[#allocation8 + $0x9d8] sm:$0xff] %v1061
    %1382 = vst [vmem:[#allocation8 + $0x9e0] sm:$0xff] %v1062
    %1383 = vst [vmem:[#allocation8 + $0x9e8] sm:$0xff] %v1063
    %1384 = vst [vmem:[#allocation8 + $0x9f0] sm:$0xff] %v1064
    %1385 = vst [vmem:[#allocation8 + $0x9f8] sm:$0xff] %v1065
    // Predicated region
    $region26: #{tpu_custom_call.1} parent=1 // pred_check
      _
    $region27: #{tpu_custom_call.1} parent=1 // pred_check_branch
      %1387 = sbr.rel (0) target = $region29
    $region28: #{tpu_custom_call.1} parent=1 // pred_region
      %s1389 = ssub.s32 40960, 40960
      %1390 = vsyncadd [#allocation4], %s1389
      %s1391 = sshll.u32 [#allocation8], 4
      %s1392 = int_to_ptr.vmem [resolvable:$true] %s1391
      %1397 = dma.vmem_to_hbm [thread:$0]  %s1392, 40960, %s3, [#allocation4], 640, 640, 40
    $region29: #{tpu_custom_call.1} parent=1 // pred_fallthru
      _
    // Predicated region
    $region30: #{tpu_custom_call.1} parent=1 // pred_check
      _
    $region31: #{tpu_custom_call.1} parent=1 // pred_check_branch
      %1399 = sbr.rel (0) target = $region33
    $region32: #{tpu_custom_call.1} parent=1 // pred_region
      %1400 = dma.done [#allocation4], 40960
    $region33: #{tpu_custom_call.1} parent=1 // pred_fallthru
      _
    %1401 = vsyncpa [#allocation3], 1
    %1402 = vsyncpa [#allocation6], 1
    %1403 = vsyncpa [#allocation4], 1

</llo_original>
